<compile_context>
chip_gen: v6e
topology: v6e:2x2x1
jax: 0.10.0
libtpu: 0.0.40
codegen_flags: <defaults>
</compile_context>

<pallas_src>
import jax
import jax.numpy as jnp
from jax.experimental import pallas as pl
from jax.experimental.pallas import tpu as pltpu


def _round_up(x: int, m: int) -> int:
    return pl.cdiv(x, m) * m


def _mlp_fwd_kernel(x_ref, w1_ref, b1_ref, w2_ref, b2_ref, o_ref):
    # x_ref:  (TM, F_in)   f32 tile of node features (cast to bf16 here)
    # w1_ref: (F_in, Hp)   bf16 first-layer weight (lane dim padded to 128)
    # b1_ref: (1, Hp)      f32
    # w2_ref: (Hp, Cp)     bf16 second-layer weight
    # b2_ref: (1, Cp)      f32
    # o_ref:  (TM, Cp)     f32 logits tile (lane-dense store)
    x = x_ref[...].astype(jnp.bfloat16)
    h = jnp.dot(x, w1_ref[...], preferred_element_type=jnp.float32) + b1_ref[...]
    h = jnp.maximum(h, 0.0)
    o = (
        jnp.dot(h.astype(jnp.bfloat16), w2_ref[...],
                preferred_element_type=jnp.float32)
        + b2_ref[...]
    )
    o_ref[...] = o.astype(o_ref.dtype)


def prepare_backbone_params(w1, b1, w2, b2):
    """Pad lane dims (H, C) to 128 and cast matmul weights to bf16.

    Call ONCE per parameter update (e.g. after each optimizer step), not on
    every forward call.
    """
    f_in, h = w1.shape
    c = w2.shape[1]
    h_pad = _round_up(h, 128)
    c_pad = _round_up(c, 128)
    return {
        "w1": jnp.pad(w1, ((0, 0), (0, h_pad - h))).astype(jnp.bfloat16),
        "b1": jnp.pad(b1.reshape(1, h), ((0, 0), (0, h_pad - h))).astype(jnp.float32),
        "w2": jnp.pad(w2, ((0, h_pad - h), (0, c_pad - c))).astype(jnp.bfloat16),
        "b2": jnp.pad(b2.reshape(1, c), ((0, 0), (0, c_pad - c))).astype(jnp.float32),
        "f_in": f_in,
        "n_classes": c,
    }


def _choose_tile_m(n: int, tile_m: int) -> int:
    # Multiple of 16 (bf16 sublane packing); never bigger than needed.
    tile = max(16, min(tile_m, _round_up(n, 16)))
    # Megacore sizing: when there is enough work, make sure the parallel row
    # grid has >= 2 tiles so both v7x TensorCores get a share.
    if n > 256 and pl.cdiv(n, tile) < 2:
        tile = _round_up(pl.cdiv(n, 2), 16)
    return tile


def _vmem_limit_bytes(tile: int, f_in: int, h_pad: int, c_pad: int) -> int:
    # Conservative estimate (assumes double-buffered weights as the fallback).
    x_bytes = 2 * tile * f_in * 4                      # f32 feature tile, 2 bufs
    o_bytes = 2 * tile * c_pad * 4                     # f32 output tile, 2 bufs
    w_bytes = 2 * 2 * (f_in * h_pad + h_pad * c_pad)   # bf16 weights, 2 bufs
    b_bytes = 2 * 4 * (h_pad + c_pad)
    act_bytes = tile * h_pad * (4 + 2) + tile * f_in * 2  # h (f32 + bf16), x bf16
    est = x_bytes + o_bytes + w_bytes + b_bytes + act_bytes
    return int(min(120 << 20, max(32 << 20, 2 * est)))


def net_forward(features, params, *, tile_m=1024, slice_cols=True):
    """Pallas implementation of NET.forward(features) for a 2-layer MLP backbone.

    features: [N, F_in] f32 (unpadded); params from prepare_backbone_params().
    Returns logits [N, C] f32 (or [N, C_pad] if slice_cols=False).
    """
    n, f_in = features.shape
    assert params["f_in"] == f_in, "feature dim mismatch with prepared params"
    w1_p, b1_p, w2_p, b2_p = params["w1"], params["b1"], params["w2"], params["b2"]
    h_pad = w1_p.shape[1]
    c_pad = w2_p.shape[1]
    c = params["n_classes"]

    tile = _choose_tile_m(n, tile_m)
    grid = (pl.cdiv(n, tile),)
    vmem_limit = _vmem_limit_bytes(tile, f_in, h_pad, c_pad)

    def _call(single_buffer_weights: bool):
        w_kw = {"pipeline_mode": pl.Buffered(1)} if single_buffer_weights else {}
        return pl.pallas_call(
            _mlp_fwd_kernel,
            out_shape=jax.ShapeDtypeStruct((n, c_pad), jnp.float32),
            grid_spec=pltpu.PrefetchScalarGridSpec(
                num_scalar_prefetch=0,
                grid=grid,
                in_specs=[
                    # Features: only pipelined traffic; unpadded, f32, ragged
                    # last row tile handled by Pallas boundary logic.
                    pl.BlockSpec((tile, f_in), lambda i: (i, 0)),
                    # Weights/biases: constant index_maps -> resident, no
                    # re-DMA between grid steps; single-buffered if supported.
                    pl.BlockSpec((f_in, h_pad), lambda i: (0, 0), **w_kw),
                    pl.BlockSpec((1, h_pad), lambda i: (0, 0), **w_kw),
                    pl.BlockSpec((h_pad, c_pad), lambda i: (0, 0), **w_kw),
                    pl.BlockSpec((1, c_pad), lambda i: (0, 0), **w_kw),
                ],
                out_specs=pl.BlockSpec((tile, c_pad), lambda i: (i, 0)),
            ),
            compiler_params=pltpu.CompilerParams(
                dimension_semantics=("parallel",),
                vmem_limit_bytes=vmem_limit,
            ),
        )(features, w1_p, b1_p, w2_p, b2_p)

    try:
        out = _call(single_buffer_weights=True)
    except Exception:
        # Fallback for JAX builds where pipeline_mode=pl.Buffered(1) is not
        # supported on the main pallas_call pipeline.
        out = _call(single_buffer_weights=False)

    if slice_cols:
        return out[:, :c]
    # Padded columns (>= C) are bias-free zeros from padded weights; callers
    # using the padded logits must ignore columns >= n_classes.
    return out


def _reference_forward(features, w1, b1, w2, b2):
    hidden = jnp.maximum(features @ w1 + b1.reshape(1, -1), 0.0)
    return hidden @ w2 + b2.reshape(1, -1)


if __name__ == "__main__":
    # 300 nodes (non-multiple of the row tile -> exercises the ragged last
    # tile), 32-d features, 64 hidden, 16 classes.  The megacore cap turns
    # this into a grid of 2 row tiles (160 + 140 rows).
    N, F_IN, HID, N_CLS = 300, 32, 64, 16

    key = jax.random.PRNGKey(0)
    k_x, k_w1, k_b1, k_w2, k_b2 = jax.random.split(key, 5)

    features = jax.random.normal(k_x, (N, F_IN), dtype=jnp.float32)
    # Deterministic synthetic backbone weights.
    w1 = jax.random.normal(k_w1, (F_IN, HID), dtype=jnp.float32) * 0.1
    b1 = jax.random.normal(k_b1, (HID,), dtype=jnp.float32) * 0.01
    w2 = jax.random.normal(k_w2, (HID, N_CLS), dtype=jnp.float32) * 0.1
    b2 = jax.random.normal(k_b2, (N_CLS,), dtype=jnp.float32) * 0.01

    # Pad/cast the parameters once (per parameter update in a training loop).
    params = prepare_backbone_params(w1, b1, w2, b2)

    out = net_forward(features, params)
    out = jax.block_until_ready(out)

    ref = _reference_forward(features, w1, b1, w2, b2)
    assert out.shape == (N, N_CLS)
    # bf16 matmul operands (f32 accumulation) vs. pure-f32 reference.
    assert jnp.allclose(out, ref, atol=5e-2, rtol=5e-2), "mismatch vs reference"

    # TODO(synk): observe()/EWC penalty (cross-entropy loss, Fisher accumulation,
    # Adam step) is training-time autograd/optimizer logic and is not kernelized;
    # only the forward pass is implemented here.
    print("KERNEL_OK")
</pallas_src>

<mosaic_0001>
module attributes {stable_mosaic.version = 11 : i64} {
  func.func @_mlp_fwd_kernel(%arg0: i32, %arg1: memref<160x32xf32, #tpu.memory_space<vmem>>, %arg2: memref<32x128xbf16, #tpu.memory_space<vmem>>, %arg3: memref<1x128xf32, #tpu.memory_space<vmem>>, %arg4: memref<128x128xbf16, #tpu.memory_space<vmem>>, %arg5: memref<1x128xf32, #tpu.memory_space<vmem>>, %arg6: memref<160x128xf32, #tpu.memory_space<vmem>>) attributes {dimension_semantics = [#tpu.dimension_semantics<parallel>], iteration_bounds = array<i64: 2>, scalar_prefetch = 0 : i64, scratch_operands = 0 : i64, tpu.core_type = #tpu.core_type<tc>, window_params = [{transform_indices = @transform_0, window_bounds = array<i64: 160, 32>}, {pipeline_mode = #tpu.pipeline_mode<synchronous>, transform_indices = @transform_1, window_bounds = array<i64: 32, 128>}, {pipeline_mode = #tpu.pipeline_mode<synchronous>, transform_indices = @transform_2, window_bounds = array<i64: 1, 128>}, {pipeline_mode = #tpu.pipeline_mode<synchronous>, transform_indices = @transform_3, window_bounds = array<i64: 128, 128>}, {pipeline_mode = #tpu.pipeline_mode<synchronous>, transform_indices = @transform_4, window_bounds = array<i64: 1, 128>}, {transform_indices = @transform_5, window_bounds = array<i64: 160, 128>}]} {
    %c0 = arith.constant 0 : index
    %c0_0 = arith.constant 0 : index
    %0 = vector.load %arg1[%c0, %c0_0] : memref<160x32xf32, #tpu.memory_space<vmem>>, vector<160x32xf32>
    %1 = arith.truncf %0 : vector<160x32xf32> to vector<160x32xbf16>
    %c0_1 = arith.constant 0 : index
    %c0_2 = arith.constant 0 : index
    %2 = vector.load %arg2[%c0_1, %c0_2] : memref<32x128xbf16, #tpu.memory_space<vmem>>, vector<32x128xbf16>
    %cst = arith.constant dense<0.000000e+00> : vector<160x128xf32>
    %3 = tpu.matmul %1, %2, %cst {dimension_numbers = #tpu.dot_dimension_numbers<[1], [0], [0], [1], [0, 0, 1, 1], [], []>} : vector<160x32xbf16>, vector<32x128xbf16>, vector<160x128xf32> -> vector<160x128xf32>
    %c0_3 = arith.constant 0 : index
    %c0_4 = arith.constant 0 : index
    %4 = vector.load %arg3[%c0_3, %c0_4] : memref<1x128xf32, #tpu.memory_space<vmem>>, vector<1x128xf32>
    %5 = vector.broadcast %4 : vector<1x128xf32> to vector<160x128xf32>
    %6 = arith.addf %3, %5 : vector<160x128xf32>
    %cst_5 = arith.constant 0.000000e+00 : f32
    %7 = vector.broadcast %cst_5 : f32 to vector<160x128xf32>
    %8 = arith.maximumf %6, %7 : vector<160x128xf32>
    %9 = arith.truncf %8 : vector<160x128xf32> to vector<160x128xbf16>
    %c0_6 = arith.constant 0 : index
    %c0_7 = arith.constant 0 : index
    %10 = vector.load %arg4[%c0_6, %c0_7] : memref<128x128xbf16, #tpu.memory_space<vmem>>, vector<128x128xbf16>
    %cst_8 = arith.constant dense<0.000000e+00> : vector<160x128xf32>
    %11 = tpu.matmul %9, %10, %cst_8 {dimension_numbers = #tpu.dot_dimension_numbers<[1], [0], [0], [1], [0, 0, 1, 1], [], []>} : vector<160x128xbf16>, vector<128x128xbf16>, vector<160x128xf32> -> vector<160x128xf32>
    %c0_9 = arith.constant 0 : index
    %c0_10 = arith.constant 0 : index
    %12 = vector.load %arg5[%c0_9, %c0_10] : memref<1x128xf32, #tpu.memory_space<vmem>>, vector<1x128xf32>
    %13 = vector.broadcast %12 : vector<1x128xf32> to vector<160x128xf32>
    %14 = arith.addf %11, %13 : vector<160x128xf32>
    %c0_11 = arith.constant 0 : index
    %c0_12 = arith.constant 0 : index
    %15 = vector.load %arg6[%c0_11, %c0_12] : memref<160x128xf32, #tpu.memory_space<vmem>>, vector<160x128xf32>
    tpu.vector_store %arg6[%c0_11, %c0_12], %14 {strides = array<i32>} : memref<160x128xf32, #tpu.memory_space<vmem>>, vector<160x128xf32>,
    return
  }
  func.func @transform_0(%arg0: i32) -> (i32, i32) {
    %c0_i32 = arith.constant 0 : i32
    %c0_i32_0 = arith.constant 0 : i32
    return %arg0, %c0_i32 : i32, i32
  }
  func.func @transform_1(%arg0: i32) -> (i32, i32) {
    %c0_i32 = arith.constant 0 : i32
    %c0_i32_0 = arith.constant 0 : i32
    %c0_i32_1 = arith.constant 0 : i32
    return %c0_i32, %c0_i32_0 : i32, i32
  }
  func.func @transform_2(%arg0: i32) -> (i32, i32) {
    %c0_i32 = arith.constant 0 : i32
    %c0_i32_0 = arith.constant 0 : i32
    %c0_i32_1 = arith.constant 0 : i32
    return %c0_i32, %c0_i32_0 : i32, i32
  }
  func.func @transform_3(%arg0: i32) -> (i32, i32) {
    %c0_i32 = arith.constant 0 : i32
    %c0_i32_0 = arith.constant 0 : i32
    %c0_i32_1 = arith.constant 0 : i32
    return %c0_i32, %c0_i32_0 : i32, i32
  }
  func.func @transform_4(%arg0: i32) -> (i32, i32) {
    %c0_i32 = arith.constant 0 : i32
    %c0_i32_0 = arith.constant 0 : i32
    %c0_i32_1 = arith.constant 0 : i32
    return %c0_i32, %c0_i32_0 : i32, i32
  }
  func.func @transform_5(%arg0: i32) -> (i32, i32) {
    %c0_i32 = arith.constant 0 : i32
    %c0_i32_0 = arith.constant 0 : i32
    return %arg0, %c0_i32 : i32, i32
  }
}

module attributes {stable_mosaic.version = 11 : i64} {
  func.func @_mlp_fwd_kernel(%arg0: i32, %arg1: memref<160x32xf32, #tpu.memory_space<vmem>>, %arg2: memref<32x128xbf16, #tpu.memory_space<vmem>>, %arg3: memref<1x128xf32, #tpu.memory_space<vmem>>, %arg4: memref<128x128xbf16, #tpu.memory_space<vmem>>, %arg5: memref<1x128xf32, #tpu.memory_space<vmem>>, %arg6: memref<160x128xf32, #tpu.memory_space<vmem>>) attributes {dimension_semantics = [#tpu.dimension_semantics<parallel>], iteration_bounds = array<i64: 2>, scalar_prefetch = 0 : i64, scratch_operands = 0 : i64, tpu.core_type = #tpu.core_type<tc>, window_params = [{transform_indices = @transform_0, window_bounds = array<i64: 160, 32>}, {pipeline_mode = #tpu.pipeline_mode<synchronous>, transform_indices = @transform_1, window_bounds = array<i64: 32, 128>}, {pipeline_mode = #tpu.pipeline_mode<synchronous>, transform_indices = @transform_2, window_bounds = array<i64: 1, 128>}, {pipeline_mode = #tpu.pipeline_mode<synchronous>, transform_indices = @transform_3, window_bounds = array<i64: 128, 128>}, {pipeline_mode = #tpu.pipeline_mode<synchronous>, transform_indices = @transform_4, window_bounds = array<i64: 1, 128>}, {transform_indices = @transform_5, window_bounds = array<i64: 160, 128>}]} {
    %c0 = arith.constant 0 : index
    %c0_0 = arith.constant 0 : index
    %0 = vector.load %arg1[%c0, %c0_0] : memref<160x32xf32, #tpu.memory_space<vmem>>, vector<160x32xf32>
    %1 = arith.truncf %0 : vector<160x32xf32> to vector<160x32xbf16>
    %c0_1 = arith.constant 0 : index
    %c0_2 = arith.constant 0 : index
    %2 = vector.load %arg2[%c0_1, %c0_2] : memref<32x128xbf16, #tpu.memory_space<vmem>>, vector<32x128xbf16>
    %cst = arith.constant dense<0.000000e+00> : vector<160x128xf32>
    %3 = tpu.matmul %1, %2, %cst {dimension_numbers = #tpu.dot_dimension_numbers<[1], [0], [0], [1], [0, 0, 1, 1], [], []>} : vector<160x32xbf16>, vector<32x128xbf16>, vector<160x128xf32> -> vector<160x128xf32>
    %c0_3 = arith.constant 0 : index
    %c0_4 = arith.constant 0 : index
    %4 = vector.load %arg3[%c0_3, %c0_4] : memref<1x128xf32, #tpu.memory_space<vmem>>, vector<1x128xf32>
    %5 = vector.broadcast %4 : vector<1x128xf32> to vector<160x128xf32>
    %6 = arith.addf %3, %5 : vector<160x128xf32>
    %cst_5 = arith.constant 0.000000e+00 : f32
    %7 = vector.broadcast %cst_5 : f32 to vector<160x128xf32>
    %8 = arith.maximumf %6, %7 : vector<160x128xf32>
    %9 = arith.truncf %8 : vector<160x128xf32> to vector<160x128xbf16>
    %c0_6 = arith.constant 0 : index
    %c0_7 = arith.constant 0 : index
    %10 = vector.load %arg4[%c0_6, %c0_7] : memref<128x128xbf16, #tpu.memory_space<vmem>>, vector<128x128xbf16>
    %cst_8 = arith.constant dense<0.000000e+00> : vector<160x128xf32>
    %11 = tpu.matmul %9, %10, %cst_8 {dimension_numbers = #tpu.dot_dimension_numbers<[1], [0], [0], [1], [0, 0, 1, 1], [], []>} : vector<160x128xbf16>, vector<128x128xbf16>, vector<160x128xf32> -> vector<160x128xf32>
    %c0_9 = arith.constant 0 : index
    %c0_10 = arith.constant 0 : index
    %12 = vector.load %arg5[%c0_9, %c0_10] : memref<1x128xf32, #tpu.memory_space<vmem>>, vector<1x128xf32>
    %13 = vector.broadcast %12 : vector<1x128xf32> to vector<160x128xf32>
    %14 = arith.addf %11, %13 : vector<160x128xf32>
    %c0_11 = arith.constant 0 : index
    %c0_12 = arith.constant 0 : index
    %15 = vector.load %arg6[%c0_11, %c0_12] : memref<160x128xf32, #tpu.memory_space<vmem>>, vector<160x128xf32>
    tpu.vector_store %arg6[%c0_11, %c0_12], %14 {strides = array<i32>} : memref<160x128xf32, #tpu.memory_space<vmem>>, vector<160x128xf32>,
    return
  }
  func.func @transform_0(%arg0: i32) -> (i32, i32) {
    %c0_i32 = arith.constant 0 : i32
    %c0_i32_0 = arith.constant 0 : i32
    return %arg0, %c0_i32 : i32, i32
  }
  func.func @transform_1(%arg0: i32) -> (i32, i32) {
    %c0_i32 = arith.constant 0 : i32
    %c0_i32_0 = arith.constant 0 : i32
    %c0_i32_1 = arith.constant 0 : i32
    return %c0_i32, %c0_i32_0 : i32, i32
  }
  func.func @transform_2(%arg0: i32) -> (i32, i32) {
    %c0_i32 = arith.constant 0 : i32
    %c0_i32_0 = arith.constant 0 : i32
    %c0_i32_1 = arith.constant 0 : i32
    return %c0_i32, %c0_i32_0 : i32, i32
  }
  func.func @transform_3(%arg0: i32) -> (i32, i32) {
    %c0_i32 = arith.constant 0 : i32
    %c0_i32_0 = arith.constant 0 : i32
    %c0_i32_1 = arith.constant 0 : i32
    return %c0_i32, %c0_i32_0 : i32, i32
  }
  func.func @transform_4(%arg0: i32) -> (i32, i32) {
    %c0_i32 = arith.constant 0 : i32
    %c0_i32_0 = arith.constant 0 : i32
    %c0_i32_1 = arith.constant 0 : i32
    return %c0_i32, %c0_i32_0 : i32, i32
  }
  func.func @transform_5(%arg0: i32) -> (i32, i32) {
    %c0_i32 = arith.constant 0 : i32
    %c0_i32_0 = arith.constant 0 : i32
    return %arg0, %c0_i32 : i32, i32
  }
}

</mosaic_0001>

<llo_original>
// kernel: tpu_custom_call.1
$region0: #{tpu_custom_call.1}
  #allocation0 [shape = 'u32[]', space=smem, size = 0x4, offset = 0x4, fixed_abs, tag = 'smem constant byte address 0x4 - core index']
  #allocation1 [shape = 'u32[144,128]{1,0:T(1,128)}', space=vmem, size = 0x12000, scoped, tag = 'internal scratch']
  %s0 = inlined_call_operand.vmem [shape: f32[300,32], index: 0, kind: input, shape index: {}]
  %s1 = inlined_call_operand.vmem [shape: bf16[32,128], index: 1, kind: input, shape index: {}]
  %s2 = inlined_call_operand.vmem [shape: f32[1,128], index: 2, kind: input, shape index: {}]
  %s3 = inlined_call_operand.vmem [shape: bf16[128,128], index: 3, kind: input, shape index: {}]
  %s4 = inlined_call_operand.vmem [shape: f32[1,128], index: 4, kind: input, shape index: {}]
  %s5 = inlined_call_operand.hbm [shape: f32[300,128], index: 5, kind: output, shape index: {}]
  %s6 = sld [smem:[#allocation0]]
  $region53: #{tpu_custom_call.1} parent=0
    _
  %s8 = ssub.s32 1, %s6
  %s9 = scalar_select 0, %s8, %s6
  $region1: #{tpu_custom_call.1} parent=0
    #allocation2 [shape = 'u8[163840]{0}', space=vmem, size = 0x28000, scoped, tag = 'output window, operand 0']
    #allocation3 [shape = 's32[2]{0}', space=sflag, size = 0x8, scoped, tag = 'scoped memory for tpu_custom_call.1']
    %10 = vsyncpa [#allocation3], 0
    %s11 = scalar_lea.sflag [#allocation3], 1
    %12 = vsyncpa %s11, 0
    loop: start=0, step=1, limit=4
    $region2: #{tpu_custom_call.1} parent=1 // loop_pre_header
      _
    $region3: #{tpu_custom_call.1} parent=1 // loop_header
      %s14 = sphi 0, %s18
      %p15 = scmp.ge.s32.totalorder %s14, 4
      %s24 = sphi 0, %s26
      %s27 = sphi 0, %s24
      %s28 = sphi 0, %s27
      %s44 = sphi 0, %s28
      %s48 = sphi 0, %s48
      %s50 = sphi 0, %s48
      %s51 = sphi 0, %s50
      %s65 = sphi 0, %s51
      %s69 = sphi 0, %s69
      %s71 = sphi 0, %s69
      %s72 = sphi 0, %s71
      %s86 = sphi 0, %s72
      %s90 = sphi 0, %s90
      %s92 = sphi 0, %s90
      %s93 = sphi 0, %s92
      %s107 = sphi 0, %s93
      %s111 = sphi 0, %s111
      %s113 = sphi 0, %s111
      %s114 = sphi 0, %s113
      %s128 = sphi 0, %s114
      %s134 = sphi 0, %s136
      %s137 = sphi 0, %s134
      %s138 = sphi 0, %s137
      %s154 = sphi 0, %s138
    $region4: #{tpu_custom_call.1} parent=1 // loop_header_branch
      %17 = sbr.rel (%p15) target = $region8
    $region5: #{tpu_custom_call.1} parent=1 // loop_body
      %s19 = ssub.s32 %s14, 1
      %s20 = ssub.s32 %s14, 2
      %s21 = sadd.s32 %s14, 1
      %s22 = ssub.s32 %s14, %s21
      %p23 = scmp.eq.s32.totalorder %s22, 0
      %s25 = sadd.s32 %s24, 1
      %s26 = scalar_select %p23, %s24, %s25
      %p29 = pneg %p23
      %p30 = scmp.eq.s32.totalorder %s14, 1
      %p31 = por %p29, %p30
      %p32 = scmp.ne.s32.totalorder %s24, %s27
      %p33 = scmp.eq.s32.totalorder %s14, 0
      %p34 = por %p32, %p33
      %p35 = scmp.ne.s32.totalorder %s24, %s27
      %p36 = scmp.eq.s32.totalorder %s19, 1
      %p37 = por %p35, %p36
      %p38 = scmp.ne.s32.totalorder %s27, %s28
      %p39 = scmp.eq.s32.totalorder %s19, 0
      %p40 = por %p38, %p39
      %p41 = scmp.ne.s32.totalorder %s27, %s28
      %p42 = scmp.eq.s32.totalorder %s20, 1
      %p43 = por %p41, %p42
      %p45 = scmp.ne.s32.totalorder %s28, %s44
      %p46 = scmp.eq.s32.totalorder %s20, 0
      %p47 = por %p45, %p46
      %s49 = sadd.s32 %s48, 1
      %p52 = scmp.eq.s32.totalorder %s14, 1
      %p53 = scmp.ne.s32.totalorder %s48, %s50
      %p54 = scmp.eq.s32.totalorder %s14, 0
      %p55 = por %p53, %p54
      %p56 = scmp.ne.s32.totalorder %s48, %s50
      %p57 = scmp.eq.s32.totalorder %s19, 1
      %p58 = por %p56, %p57
      %p59 = scmp.ne.s32.totalorder %s50, %s51
      %p60 = scmp.eq.s32.totalorder %s19, 0
      %p61 = por %p59, %p60
      %p62 = scmp.ne.s32.totalorder %s50, %s51
      %p63 = scmp.eq.s32.totalorder %s20, 1
      %p64 = por %p62, %p63
      %p66 = scmp.ne.s32.totalorder %s51, %s65
      %p67 = scmp.eq.s32.totalorder %s20, 0
      %p68 = por %p66, %p67
      %s70 = sadd.s32 %s69, 1
      %p73 = scmp.eq.s32.totalorder %s14, 1
      %p74 = scmp.ne.s32.totalorder %s69, %s71
      %p75 = scmp.eq.s32.totalorder %s14, 0
      %p76 = por %p74, %p75
      %p77 = scmp.ne.s32.totalorder %s69, %s71
      %p78 = scmp.eq.s32.totalorder %s19, 1
      %p79 = por %p77, %p78
      %p80 = scmp.ne.s32.totalorder %s71, %s72
      %p81 = scmp.eq.s32.totalorder %s19, 0
      %p82 = por %p80, %p81
      %p83 = scmp.ne.s32.totalorder %s71, %s72
      %p84 = scmp.eq.s32.totalorder %s20, 1
      %p85 = por %p83, %p84
      %p87 = scmp.ne.s32.totalorder %s72, %s86
      %p88 = scmp.eq.s32.totalorder %s20, 0
      %p89 = por %p87, %p88
      %s91 = sadd.s32 %s90, 1
      %p94 = scmp.eq.s32.totalorder %s14, 1
      %p95 = scmp.ne.s32.totalorder %s90, %s92
      %p96 = scmp.eq.s32.totalorder %s14, 0
      %p97 = por %p95, %p96
      %p98 = scmp.ne.s32.totalorder %s90, %s92
      %p99 = scmp.eq.s32.totalorder %s19, 1
      %p100 = por %p98, %p99
      %p101 = scmp.ne.s32.totalorder %s92, %s93
      %p102 = scmp.eq.s32.totalorder %s19, 0
      %p103 = por %p101, %p102
      %p104 = scmp.ne.s32.totalorder %s92, %s93
      %p105 = scmp.eq.s32.totalorder %s20, 1
      %p106 = por %p104, %p105
      %p108 = scmp.ne.s32.totalorder %s93, %s107
      %p109 = scmp.eq.s32.totalorder %s20, 0
      %p110 = por %p108, %p109
      %s112 = sadd.s32 %s111, 1
      %p115 = scmp.eq.s32.totalorder %s14, 1
      %p116 = scmp.ne.s32.totalorder %s111, %s113
      %p117 = scmp.eq.s32.totalorder %s14, 0
      %p118 = por %p116, %p117
      %p119 = scmp.ne.s32.totalorder %s111, %s113
      %p120 = scmp.eq.s32.totalorder %s19, 1
      %p121 = por %p119, %p120
      %p122 = scmp.ne.s32.totalorder %s113, %s114
      %p123 = scmp.eq.s32.totalorder %s19, 0
      %p124 = por %p122, %p123
      %p125 = scmp.ne.s32.totalorder %s113, %s114
      %p126 = scmp.eq.s32.totalorder %s20, 1
      %p127 = por %p125, %p126
      %p129 = scmp.ne.s32.totalorder %s114, %s128
      %p130 = scmp.eq.s32.totalorder %s20, 0
      %p131 = por %p129, %p130
      %s132 = ssub.s32 %s14, %s21
      %p133 = scmp.eq.s32.totalorder %s132, 0
      %s135 = sadd.s32 %s134, 1
      %s136 = scalar_select %p133, %s134, %s135
      %p139 = pneg %p133
      %p140 = scmp.eq.s32.totalorder %s14, 1
      %p141 = por %p139, %p140
      %p142 = scmp.ne.s32.totalorder %s134, %s137
      %p143 = scmp.eq.s32.totalorder %s14, 0
      %p144 = por %p142, %p143
      %p145 = scmp.ne.s32.totalorder %s134, %s137
      %p146 = scmp.eq.s32.totalorder %s19, 1
      %p147 = por %p145, %p146
      %p148 = scmp.ne.s32.totalorder %s137, %s138
      %p149 = scmp.eq.s32.totalorder %s19, 0
      %p150 = por %p148, %p149
      %p151 = scmp.ne.s32.totalorder %s137, %s138
      %p152 = scmp.eq.s32.totalorder %s20, 1
      %p153 = por %p151, %p152
      %p155 = scmp.ne.s32.totalorder %s138, %s154
      %p156 = scmp.eq.s32.totalorder %s20, 0
      %p157 = por %p155, %p156
      %p158 = scmp.le.s32.totalorder 1, %s14
      %p159 = scmp.lt.s32.totalorder %s14, 3
      %p160 = pnand %p158, %p159
      %p161 = pneg %p160
      // Predicated region
      $region9: #{tpu_custom_call.1} parent=5 // pred_check
        _
      $region10: #{tpu_custom_call.1} parent=5 // pred_check_branch
        %163 = sbr.rel (%p160) target = $region12
      $region11: #{tpu_custom_call.1} parent=5 // pred_region
        %s164 = ssub.s32 %s14, 1
        // Predicated region
        $region13: #{tpu_custom_call.1} parent=11 // pred_check
          %p165 = pneg %p61
        $region14: #{tpu_custom_call.1} parent=11 // pred_check_branch
          %167 = sbr.rel (%p165) target = $region16
        $region15: #{tpu_custom_call.1} parent=11 // pred_region
          _
        $region16: #{tpu_custom_call.1} parent=11 // pred_fallthru
          _
        // Predicated region
        $region17: #{tpu_custom_call.1} parent=11 // pred_check
          %p168 = pneg %p82
        $region18: #{tpu_custom_call.1} parent=11 // pred_check_branch
          %170 = sbr.rel (%p168) target = $region20
        $region19: #{tpu_custom_call.1} parent=11 // pred_region
          _
        $region20: #{tpu_custom_call.1} parent=11 // pred_fallthru
          _
        // Predicated region
        $region21: #{tpu_custom_call.1} parent=11 // pred_check
          %p171 = pneg %p103
        $region22: #{tpu_custom_call.1} parent=11 // pred_check_branch
          %173 = sbr.rel (%p171) target = $region24
        $region23: #{tpu_custom_call.1} parent=11 // pred_region
          _
        $region24: #{tpu_custom_call.1} parent=11 // pred_fallthru
          _
        // Predicated region
        $region25: #{tpu_custom_call.1} parent=11 // pred_check
          %p174 = pneg %p124
        $region26: #{tpu_custom_call.1} parent=11 // pred_check_branch
          %176 = sbr.rel (%p174) target = $region28
        $region27: #{tpu_custom_call.1} parent=11 // pred_region
          _
        $region28: #{tpu_custom_call.1} parent=11 // pred_fallthru
          _
      $region12: #{tpu_custom_call.1} parent=5 // pred_fallthru
        _
      %p177 = scmp.lt.s32.totalorder %s14, 2
      // Predicated region
      $region29: #{tpu_custom_call.1} parent=5 // pred_check
        %p178 = pneg %p177
      $region30: #{tpu_custom_call.1} parent=5 // pred_check_branch
        %180 = sbr.rel (%p178) target = $region32
      $region31: #{tpu_custom_call.1} parent=5 // pred_region
        // Predicated region
        $region33: #{tpu_custom_call.1} parent=31 // pred_check
          %p181 = pneg %p34
        $region34: #{tpu_custom_call.1} parent=31 // pred_check_branch
          %183 = sbr.rel (%p181) target = $region36
        $region35: #{tpu_custom_call.1} parent=31 // pred_region
          %s184 = smul.u32 20, %s14
          %s185 = ssub.s32 38, %s184
          %p186 = scmp.lt.s32.totalorder %s185, 20
          %s187 = scalar_select %p186, %s185, 20
          %s188 = smul.u32 128, %s187
          %p189 = scmp.lt.s32.totalorder %s184, 37
          %s190 = scalar_select %p189, %s184, 37
          %s191 = smul.addr %s190, 8
          %s192 = scalar_lea.vmem %s0, %s191
          %s193 = smul.u32 20, %s14
          %s194 = ssub.s32 38, %s193
          %p195 = scmp.lt.s32.totalorder %s194, 20
          %s196 = scalar_select %p195, %s194, 20
          %s197 = smul.u32 128, %s196
        $region36: #{tpu_custom_call.1} parent=31 // pred_fallthru
          _
      $region32: #{tpu_custom_call.1} parent=5 // pred_fallthru
        _
      %p198 = scmp.le.s32.totalorder 1, %s14
      %p199 = scmp.lt.s32.totalorder %s14, 3
      %p200 = pnand %p198, %p199
      %p201 = pneg %p200
      // Predicated region
      $region37: #{tpu_custom_call.1} parent=5 // pred_check
        _
      $region38: #{tpu_custom_call.1} parent=5 // pred_check_branch
        %203 = sbr.rel (%p200) target = $region40
      $region39: #{tpu_custom_call.1} parent=5 // pred_region
        %s204 = ssub.s32 %s14, 1
        %s205 = smul.u32 20, %s19
        %s206 = ssub.s32 38, %s205
        %p207 = scmp.lt.s32.totalorder %s206, 20
        %s208 = scalar_select %p207, %s206, 20
        %s209 = smul.u32 128, %s208
        %p210 = scmp.lt.s32.totalorder %s205, 37
        %s211 = scalar_select %p210, %s205, 37
        %s212 = smul.addr %s211, 8
        %s213 = scalar_lea.vmem %s0, %s212
        %p214 = pneg %p40
        %p215 = pneg %p37
        %p216 = pneg %p61
        %p217 = pneg %p58
        %p218 = pneg %p82
        %p219 = pneg %p79
        %p220 = pneg %p103
        %p221 = pneg %p100
        %p222 = pneg %p124
        %p223 = pneg %p121
        %p224 = pneg %p150
        %p225 = pneg %p147
        %s226 = sand.u32 %s137, 1
        %s227 = scalar_lea.sflag [#allocation3], %s226
        %s228 = sand.u32 %s137, 1
        %s229 = smul.addr %s228, 160
        %s230 = scalar_lea.vmem [#allocation2], %s229
        %s231 = smul.u32 20, %s19
        %s232 = ssub.s32 38, %s231
        %p233 = scmp.lt.s32.totalorder %s232, 20
        %s234 = scalar_select %p233, %s232, 20
        %s235 = smul.u32 128, %s234
        %p236 = scmp.lt.s32.totalorder %s231, 37
        %s237 = scalar_select %p236, %s231, 37
        %s238 = smul.addr %s237, 8
        %s239 = scalar_lea.vmem %s0, %s238
        %s240 = smul.u32 20, %s19
        %s241 = ssub.s32 38, %s240
        %p242 = scmp.lt.s32.totalorder %s241, 20
        %s243 = scalar_select %p242, %s241, 20
        %s244 = smul.u32 128, %s243
        %s245 = smul.u32 20, %s19
        %s246 = ssub.s32 38, %s245
        %p247 = scmp.lt.s32.totalorder %s246, 20
        %s248 = scalar_select %p247, %s246, 20
        %s249 = smul.u32 128, %s248
        %v251 = vld [vmem:[%s239] sm:$0xff]
        %v252 = vld [vmem:[%s239 + $0x8] sm:$0xff]
        %v253 = vld [vmem:[%s239 + $0x10] sm:$0xff]
        %v254 = vld [vmem:[%s239 + $0x18] sm:$0xff]
        %v255 = vld [vmem:[%s239 + $0x20] sm:$0xff]
        %v256 = vld [vmem:[%s239 + $0x28] sm:$0xff]
        %v257 = vld [vmem:[%s239 + $0x30] sm:$0xff]
        %v258 = vld [vmem:[%s239 + $0x38] sm:$0xff]
        %v259 = vld [vmem:[%s239 + $0x40] sm:$0xff]
        %v260 = vld [vmem:[%s239 + $0x48] sm:$0xff]
        %v261 = vld [vmem:[%s239 + $0x50] sm:$0xff]
        %v262 = vld [vmem:[%s239 + $0x58] sm:$0xff]
        %v263 = vld [vmem:[%s239 + $0x60] sm:$0xff]
        %v264 = vld [vmem:[%s239 + $0x68] sm:$0xff]
        %v265 = vld [vmem:[%s239 + $0x70] sm:$0xff]
        %v266 = vld [vmem:[%s239 + $0x78] sm:$0xff]
        %v267 = vld [vmem:[%s239 + $0x80] sm:$0xff]
        %v268 = vld [vmem:[%s239 + $0x88] sm:$0xff]
        %v269 = vld [vmem:[%s239 + $0x90] sm:$0xff]
        %v270 = vld [vmem:[%s239 + $0x98] sm:$0xff]
        %v271 = vpack.c.bf16 %v252, %v251
        %v272 = vpack.c.bf16 %v254, %v253
        %v273 = vpack.c.bf16 %v256, %v255
        %v274 = vpack.c.bf16 %v258, %v257
        %v275 = vpack.c.bf16 %v260, %v259
        %v276 = vpack.c.bf16 %v262, %v261
        %v277 = vpack.c.bf16 %v264, %v263
        %v278 = vpack.c.bf16 %v266, %v265
        %v279 = vpack.c.bf16 %v268, %v267
        %v280 = vpack.c.bf16 %v270, %v269
        %v281 = vld [vmem:[%s1] sm:$0xf]
        %v282 = vld [vmem:[%s1 + $0x4] sm:$0xf]
        %v283 = vld [vmem:[%s1 + $0x8] sm:$0xf]
        %v284 = vld [vmem:[%s1 + $0xc] sm:$0xf]
        %v285 = vld [vmem:[%s2] sm:$0x1]
        %v287 = vlaneseq
        %v288 = vshrl.u32 %v287, 7
        %v289 = vsub.s32 0, %v288
        %v290 = vrot.slane %v285, %v289
        %v296 = vunpack.c.l.b16 %v281
        %v297 = vunpack.c.l.b16 %v282
        %v298 = vunpack.c.l.b16 %v283
        %v299 = vunpack.c.l.b16 %v284
        %v300 = vpack.c.b16 %v297, %v296
        %v301 = vpack.c.b16 %v299, %v298
        %vm304 = vcmask 261120
        %v306 = vsel %vm304, %v271, 0
        %v309 = vsel %vm304, %v272, 0
        %v312 = vsel %vm304, %v273, 0
        %v315 = vsel %vm304, %v274, 0
        %v318 = vsel %vm304, %v275, 0
        %v321 = vsel %vm304, %v276, 0
        %v324 = vsel %vm304, %v277, 0
        %v327 = vsel %vm304, %v278, 0
        %v330 = vsel %vm304, %v279, 0
        %v333 = vsel %vm304, %v280, 0
        %335 = vmatprep.subr.bf16.mxu0 0
        %336 = vmatpush1.bf16.msra.mxu0 0
        %337 = vmatprep.subr.bf16.mxu0 0
        %338 = vmatpush1.bf16.msra.mxu0 0
        %339 = vmatprep.subr.bf16.mxu0 0
        %340 = vmatpush1.bf16.msra.mxu0 0
        %341 = vmatprep.subr.bf16.mxu0 0
        %342 = vmatpush1.bf16.msra.mxu0 0
        %343 = vmatprep.subr.bf16.mxu0 0
        %344 = vmatpush1.bf16.msra.mxu0 0
        %345 = vmatprep.subr.bf16.mxu0 0
        %346 = vmatpush1.bf16.msra.mxu0 0
        %347 = vmatprep.subr.bf16.mxu0 0
        %348 = vmatpush1.bf16.msra.mxu0 %v301
        %349 = vmatprep.subr.bf16.mxu0 0
        %350 = vmatpush1.bf16.msra.mxu0 %v300
        %351 = vmatprep.subr.bf16.mxu0 0
        %352 = vmatpush2.bf16.msra.mxu0 0
        %353 = vmatprep.subr.bf16.mxu0 0
        %354 = vmatpush2.bf16.msra.mxu0 0
        %355 = vmatprep.subr.bf16.mxu0 0
        %356 = vmatpush2.bf16.msra.mxu0 0
        %357 = vmatprep.subr.bf16.mxu0 0
        %358 = vmatpush2.bf16.msra.mxu0 0
        %359 = vmatprep.subr.bf16.mxu0 0
        %360 = vmatpush2.bf16.msra.mxu0 0
        %361 = vmatprep.subr.bf16.mxu0 0
        %362 = vmatpush2.bf16.msra.mxu0 0
        %363 = vmatprep.subr.bf16.mxu0 0
        %364 = vmatpush2.bf16.msra.mxu0 0
        %365 = vmatprep.subr.bf16.mxu0 0
        %366 = vmatpush2.bf16.msra.mxu0 0
        %367 = vmatprep.mubr.bf16.mxu0 0
        %368 = vmatmul.mubr.bf16.gmra.mxu0 %v306
        %v369 = vpop.f32.mrf.mxu0
        %v370 = vadd.f32 %v290, %v369
        %v371 = vpop.f32.mrf.mxu0
        %v372 = vpop.f32.mrf.mxu0
        %v373 = vadd.f32 %v290, %v372
        %v374 = vpop.f32.mrf.mxu0
        %375 = vmatprep.mubr.bf16.mxu0 0
        %376 = vmatmul.mubr.bf16.gmra.mxu0 %v309
        %v377 = vpop.f32.mrf.mxu0
        %v378 = vadd.f32 %v290, %v377
        %v379 = vpop.f32.mrf.mxu0
        %v380 = vpop.f32.mrf.mxu0
        %v381 = vadd.f32 %v290, %v380
        %v382 = vpop.f32.mrf.mxu0
        %383 = vmatprep.mubr.bf16.mxu0 0
        %384 = vmatmul.mubr.bf16.gmra.mxu0 %v312
        %v385 = vpop.f32.mrf.mxu0
        %v386 = vadd.f32 %v290, %v385
        %v387 = vpop.f32.mrf.mxu0
        %v388 = vpop.f32.mrf.mxu0
        %v389 = vadd.f32 %v290, %v388
        %v390 = vpop.f32.mrf.mxu0
        %391 = vmatprep.mubr.bf16.mxu0 0
        %392 = vmatmul.mubr.bf16.gmra.mxu0 %v315
        %v393 = vpop.f32.mrf.mxu0
        %v394 = vadd.f32 %v290, %v393
        %v395 = vpop.f32.mrf.mxu0
        %v396 = vpop.f32.mrf.mxu0
        %v397 = vadd.f32 %v290, %v396
        %v398 = vpop.f32.mrf.mxu0
        %399 = vmatprep.mubr.bf16.mxu0 0
        %400 = vmatmul.mubr.bf16.gmra.mxu0 %v318
        %v401 = vpop.f32.mrf.mxu0
        %v402 = vadd.f32 %v290, %v401
        %v403 = vpop.f32.mrf.mxu0
        %v404 = vpop.f32.mrf.mxu0
        %v405 = vadd.f32 %v290, %v404
        %v406 = vpop.f32.mrf.mxu0
        %407 = vmatprep.mubr.bf16.mxu0 0
        %408 = vmatmul.mubr.bf16.gmra.mxu0 %v321
        %v409 = vpop.f32.mrf.mxu0
        %v410 = vadd.f32 %v290, %v409
        %v411 = vpop.f32.mrf.mxu0
        %v412 = vpop.f32.mrf.mxu0
        %v413 = vadd.f32 %v290, %v412
        %v414 = vpop.f32.mrf.mxu0
        %415 = vmatprep.mubr.bf16.mxu0 0
        %416 = vmatmul.mubr.bf16.gmra.mxu0 %v324
        %v417 = vpop.f32.mrf.mxu0
        %v418 = vadd.f32 %v290, %v417
        %v419 = vpop.f32.mrf.mxu0
        %v420 = vpop.f32.mrf.mxu0
        %v421 = vadd.f32 %v290, %v420
        %v422 = vpop.f32.mrf.mxu0
        %423 = vmatprep.mubr.bf16.mxu0 0
        %424 = vmatmul.mubr.bf16.gmra.mxu0 %v327
        %v425 = vpop.f32.mrf.mxu0
        %v426 = vadd.f32 %v290, %v425
        %v427 = vpop.f32.mrf.mxu0
        %v428 = vpop.f32.mrf.mxu0
        %v429 = vadd.f32 %v290, %v428
        %v430 = vpop.f32.mrf.mxu0
        %431 = vmatprep.mubr.bf16.mxu0 0
        %432 = vmatmul.mubr.bf16.gmra.mxu0 %v330
        %v433 = vpop.f32.mrf.mxu0
        %v434 = vadd.f32 %v290, %v433
        %v435 = vpop.f32.mrf.mxu0
        %v436 = vpop.f32.mrf.mxu0
        %v437 = vadd.f32 %v290, %v436
        %v438 = vpop.f32.mrf.mxu0
        %439 = vmatprep.mubr.bf16.mxu0 0
        %440 = vmatmul.mubr.bf16.gmra.mxu0 %v333
        %v441 = vpop.f32.mrf.mxu0
        %v442 = vadd.f32 %v290, %v441
        %v443 = vpop.f32.mrf.mxu0
        %v444 = vpop.f32.mrf.mxu0
        %v445 = vadd.f32 %v290, %v444
        %v446 = vpop.f32.mrf.mxu0
        %447 = vdwg.mxu0
        %v448 = vmax.f32 %v370, 0.0
        %v449 = vmax.f32 %v373, 0.0
        %v450 = vmax.f32 %v378, 0.0
        %v451 = vmax.f32 %v381, 0.0
        %v452 = vmax.f32 %v386, 0.0
        %v453 = vmax.f32 %v389, 0.0
        %v454 = vmax.f32 %v394, 0.0
        %v455 = vmax.f32 %v397, 0.0
        %v456 = vmax.f32 %v402, 0.0
        %v457 = vmax.f32 %v405, 0.0
        %v458 = vmax.f32 %v410, 0.0
        %v459 = vmax.f32 %v413, 0.0
        %v460 = vmax.f32 %v418, 0.0
        %v461 = vmax.f32 %v421, 0.0
        %v462 = vmax.f32 %v426, 0.0
        %v463 = vmax.f32 %v429, 0.0
        %v464 = vmax.f32 %v434, 0.0
        %v465 = vmax.f32 %v437, 0.0
        %v466 = vmax.f32 %v442, 0.0
        %v467 = vmax.f32 %v445, 0.0
        %v468 = vpack.c.bf16 %v449, %v448
        %v469 = vpack.c.bf16 %v451, %v450
        %v470 = vpack.c.bf16 %v453, %v452
        %v471 = vpack.c.bf16 %v455, %v454
        %v472 = vpack.c.bf16 %v457, %v456
        %v473 = vpack.c.bf16 %v459, %v458
        %v474 = vpack.c.bf16 %v461, %v460
        %v475 = vpack.c.bf16 %v463, %v462
        %v476 = vpack.c.bf16 %v465, %v464
        %v477 = vpack.c.bf16 %v467, %v466
        %v478 = vld [vmem:[%s3] sm:$0xf]
        %v479 = vld [vmem:[%s3 + $0x4] sm:$0xf]
        %v480 = vld [vmem:[%s3 + $0x8] sm:$0xf]
        %v481 = vld [vmem:[%s3 + $0xc] sm:$0xf]
        %v482 = vld [vmem:[%s3 + $0x10] sm:$0xf]
        %v483 = vld [vmem:[%s3 + $0x14] sm:$0xf]
        %v484 = vld [vmem:[%s3 + $0x18] sm:$0xf]
        %v485 = vld [vmem:[%s3 + $0x1c] sm:$0xf]
        %v486 = vld [vmem:[%s3 + $0x20] sm:$0xf]
        %v487 = vld [vmem:[%s3 + $0x24] sm:$0xf]
        %v488 = vld [vmem:[%s3 + $0x28] sm:$0xf]
        %v489 = vld [vmem:[%s3 + $0x2c] sm:$0xf]
        %v490 = vld [vmem:[%s3 + $0x30] sm:$0xf]
        %v491 = vld [vmem:[%s3 + $0x34] sm:$0xf]
        %v492 = vld [vmem:[%s3 + $0x38] sm:$0xf]
        %v493 = vld [vmem:[%s3 + $0x3c] sm:$0xf]
        %v494 = vld [vmem:[%s4] sm:$0x1]
        %v496 = vlaneseq
        %v497 = vshrl.u32 %v496, 7
        %v498 = vsub.s32 0, %v497
        %v499 = vrot.slane %v494, %v498
        %v517 = vunpack.c.l.b16 %v478
        %v518 = vunpack.c.l.b16 %v479
        %v519 = vunpack.c.l.b16 %v480
        %v520 = vunpack.c.l.b16 %v481
        %v521 = vunpack.c.l.b16 %v482
        %v522 = vunpack.c.l.b16 %v483
        %v523 = vunpack.c.l.b16 %v484
        %v524 = vunpack.c.l.b16 %v485
        %v525 = vunpack.c.l.b16 %v486
        %v526 = vunpack.c.l.b16 %v487
        %v527 = vunpack.c.l.b16 %v488
        %v528 = vunpack.c.l.b16 %v489
        %v529 = vunpack.c.l.b16 %v490
        %v530 = vunpack.c.l.b16 %v491
        %v531 = vunpack.c.l.b16 %v492
        %v532 = vunpack.c.l.b16 %v493
        %v533 = vpack.c.b16 %v518, %v517
        %v534 = vpack.c.b16 %v520, %v519
        %v535 = vpack.c.b16 %v522, %v521
        %v536 = vpack.c.b16 %v524, %v523
        %v537 = vpack.c.b16 %v526, %v525
        %v538 = vpack.c.b16 %v528, %v527
        %v539 = vpack.c.b16 %v530, %v529
        %v540 = vpack.c.b16 %v532, %v531
        %549 = vmatprep.subr.bf16.mxu0 0
        %550 = vmatpush1.bf16.msra.mxu0 %v540
        %551 = vmatprep.subr.bf16.mxu0 0
        %552 = vmatpush1.bf16.msra.mxu0 %v539
        %553 = vmatprep.subr.bf16.mxu0 0
        %554 = vmatpush1.bf16.msra.mxu0 %v538
        %555 = vmatprep.subr.bf16.mxu0 0
        %556 = vmatpush1.bf16.msra.mxu0 %v537
        %557 = vmatprep.subr.bf16.mxu0 0
        %558 = vmatpush1.bf16.msra.mxu0 %v536
        %559 = vmatprep.subr.bf16.mxu0 0
        %560 = vmatpush1.bf16.msra.mxu0 %v535
        %561 = vmatprep.subr.bf16.mxu0 0
        %562 = vmatpush1.bf16.msra.mxu0 %v534
        %563 = vmatprep.subr.bf16.mxu0 0
        %564 = vmatpush1.bf16.msra.mxu0 %v533
        %565 = vmatprep.subr.bf16.mxu0 0
        %566 = vmatpush2.bf16.msra.mxu0 0
        %567 = vmatprep.subr.bf16.mxu0 0
        %568 = vmatpush2.bf16.msra.mxu0 0
        %569 = vmatprep.subr.bf16.mxu0 0
        %570 = vmatpush2.bf16.msra.mxu0 0
        %571 = vmatprep.subr.bf16.mxu0 0
        %572 = vmatpush2.bf16.msra.mxu0 0
        %573 = vmatprep.subr.bf16.mxu0 0
        %574 = vmatpush2.bf16.msra.mxu0 0
        %575 = vmatprep.subr.bf16.mxu0 0
        %576 = vmatpush2.bf16.msra.mxu0 0
        %577 = vmatprep.subr.bf16.mxu0 0
        %578 = vmatpush2.bf16.msra.mxu0 0
        %579 = vmatprep.subr.bf16.mxu0 0
        %580 = vmatpush2.bf16.msra.mxu0 0
        %581 = vmatprep.mubr.bf16.mxu0 0
        %582 = vmatmul.mubr.bf16.gmra.mxu0 %v468
        %v583 = vpop.f32.mrf.mxu0
        %v584 = vadd.f32 %v499, %v583
        %v585 = vpop.f32.mrf.mxu0
        %v586 = vpop.f32.mrf.mxu0
        %v587 = vadd.f32 %v499, %v586
        %v588 = vpop.f32.mrf.mxu0
        %589 = vmatprep.mubr.bf16.mxu0 0
        %590 = vmatmul.mubr.bf16.gmra.mxu0 %v469
        %v591 = vpop.f32.mrf.mxu0
        %v592 = vadd.f32 %v499, %v591
        %v593 = vpop.f32.mrf.mxu0
        %v594 = vpop.f32.mrf.mxu0
        %v595 = vadd.f32 %v499, %v594
        %v596 = vpop.f32.mrf.mxu0
        %597 = vmatprep.mubr.bf16.mxu0 0
        %598 = vmatmul.mubr.bf16.gmra.mxu0 %v470
        %v599 = vpop.f32.mrf.mxu0
        %v600 = vadd.f32 %v499, %v599
        %v601 = vpop.f32.mrf.mxu0
        %v602 = vpop.f32.mrf.mxu0
        %v603 = vadd.f32 %v499, %v602
        %v604 = vpop.f32.mrf.mxu0
        %605 = vmatprep.mubr.bf16.mxu0 0
        %606 = vmatmul.mubr.bf16.gmra.mxu0 %v471
        %v607 = vpop.f32.mrf.mxu0
        %v608 = vadd.f32 %v499, %v607
        %v609 = vpop.f32.mrf.mxu0
        %v610 = vpop.f32.mrf.mxu0
        %v611 = vadd.f32 %v499, %v610
        %v612 = vpop.f32.mrf.mxu0
        %613 = vmatprep.mubr.bf16.mxu0 0
        %614 = vmatmul.mubr.bf16.gmra.mxu0 %v472
        %v615 = vpop.f32.mrf.mxu0
        %v616 = vadd.f32 %v499, %v615
        %v617 = vpop.f32.mrf.mxu0
        %v618 = vpop.f32.mrf.mxu0
        %v619 = vadd.f32 %v499, %v618
        %v620 = vpop.f32.mrf.mxu0
        %621 = vmatprep.mubr.bf16.mxu0 0
        %622 = vmatmul.mubr.bf16.gmra.mxu0 %v473
        %v623 = vpop.f32.mrf.mxu0
        %v624 = vadd.f32 %v499, %v623
        %v625 = vpop.f32.mrf.mxu0
        %v626 = vpop.f32.mrf.mxu0
        %v627 = vadd.f32 %v499, %v626
        %v628 = vpop.f32.mrf.mxu0
        %629 = vmatprep.mubr.bf16.mxu0 0
        %630 = vmatmul.mubr.bf16.gmra.mxu0 %v474
        %v631 = vpop.f32.mrf.mxu0
        %v632 = vadd.f32 %v499, %v631
        %v633 = vpop.f32.mrf.mxu0
        %v634 = vpop.f32.mrf.mxu0
        %v635 = vadd.f32 %v499, %v634
        %v636 = vpop.f32.mrf.mxu0
        %637 = vmatprep.mubr.bf16.mxu0 0
        %638 = vmatmul.mubr.bf16.gmra.mxu0 %v475
        %v639 = vpop.f32.mrf.mxu0
        %v640 = vadd.f32 %v499, %v639
        %v641 = vpop.f32.mrf.mxu0
        %v642 = vpop.f32.mrf.mxu0
        %v643 = vadd.f32 %v499, %v642
        %v644 = vpop.f32.mrf.mxu0
        %645 = vmatprep.mubr.bf16.mxu0 0
        %646 = vmatmul.mubr.bf16.gmra.mxu0 %v476
        %v647 = vpop.f32.mrf.mxu0
        %v648 = vadd.f32 %v499, %v647
        %v649 = vpop.f32.mrf.mxu0
        %v650 = vpop.f32.mrf.mxu0
        %v651 = vadd.f32 %v499, %v650
        %v652 = vpop.f32.mrf.mxu0
        %653 = vmatprep.mubr.bf16.mxu0 0
        %654 = vmatmul.mubr.bf16.gmra.mxu0 %v477
        %v655 = vpop.f32.mrf.mxu0
        %v656 = vadd.f32 %v499, %v655
        %v657 = vpop.f32.mrf.mxu0
        %v658 = vpop.f32.mrf.mxu0
        %v659 = vadd.f32 %v499, %v658
        %v660 = vpop.f32.mrf.mxu0
        %661 = vdwg.mxu0
        %662 = vst [vmem:[%s230] sm:$0xff] %v584
        %663 = vst [vmem:[%s230 + $0x8] sm:$0xff] %v587
        %664 = vst [vmem:[%s230 + $0x10] sm:$0xff] %v592
        %665 = vst [vmem:[%s230 + $0x18] sm:$0xff] %v595
        %666 = vst [vmem:[%s230 + $0x20] sm:$0xff] %v600
        %667 = vst [vmem:[%s230 + $0x28] sm:$0xff] %v603
        %668 = vst [vmem:[%s230 + $0x30] sm:$0xff] %v608
        %669 = vst [vmem:[%s230 + $0x38] sm:$0xff] %v611
        %670 = vst [vmem:[%s230 + $0x40] sm:$0xff] %v616
        %671 = vst [vmem:[%s230 + $0x48] sm:$0xff] %v619
        %672 = vst [vmem:[%s230 + $0x50] sm:$0xff] %v624
        %673 = vst [vmem:[%s230 + $0x58] sm:$0xff] %v627
        %674 = vst [vmem:[%s230 + $0x60] sm:$0xff] %v632
        %675 = vst [vmem:[%s230 + $0x68] sm:$0xff] %v635
        %676 = vst [vmem:[%s230 + $0x70] sm:$0xff] %v640
        %677 = vst [vmem:[%s230 + $0x78] sm:$0xff] %v643
        %678 = vst [vmem:[%s230 + $0x80] sm:$0xff] %v648
        %679 = vst [vmem:[%s230 + $0x88] sm:$0xff] %v651
        %680 = vst [vmem:[%s230 + $0x90] sm:$0xff] %v656
        %681 = vst [vmem:[%s230 + $0x98] sm:$0xff] %v659
        %s682 = sand.u32 %s137, 1
        %s683 = scalar_lea.sflag [#allocation3], %s682
        %s684 = sand.u32 %s137, 1
        %s685 = smul.addr %s684, 160
        %s686 = scalar_lea.vmem [#allocation2], %s685
        // Predicated region
        $region41: #{tpu_custom_call.1} parent=39 // pred_check
          %p687 = pneg %p147
        $region42: #{tpu_custom_call.1} parent=39 // pred_check_branch
          %689 = sbr.rel (%p687) target = $region44
        $region43: #{tpu_custom_call.1} parent=39 // pred_region
          %s690 = smul.u32 20, %s19
          %s691 = ssub.s32 38, %s690
          %p692 = scmp.lt.s32.totalorder %s691, 20
          %s693 = scalar_select %p692, %s691, 20
          %s694 = smul.u32 128, %s693
          %s696 = ssub.s32 2560, %s694
          %697 = vsyncadd %s683, %s696
          %p698 = scmp.ne.s32.totalorder 0, %s694
          %s699 = smul.addr %s690, 128
          %s700 = scalar_lea.hbm %s5, %s699
          %s701 = smul.u32 8, %s693
          %s702 = sshll.u32 %s686, 4
          %s703 = int_to_ptr.vmem [resolvable:$true] %s702
          %s704 = sshll.u32 %s701, 4
          %708 = dma.vmem_to_hbm [thread:$0]  (%p698), %s703, %s704, %s700, %s683, 128, 128, 8
        $region44: #{tpu_custom_call.1} parent=39 // pred_fallthru
          _
      $region40: #{tpu_custom_call.1} parent=5 // pred_fallthru
        _
      %p709 = scmp.le.s32.totalorder 2, %s14
      // Predicated region
      $region45: #{tpu_custom_call.1} parent=5 // pred_check
        %p710 = pneg %p709
      $region46: #{tpu_custom_call.1} parent=5 // pred_check_branch
        %712 = sbr.rel (%p710) target = $region48
      $region47: #{tpu_custom_call.1} parent=5 // pred_region
        %s713 = ssub.s32 %s14, 2
        // Predicated region
        $region49: #{tpu_custom_call.1} parent=47 // pred_check
          %p714 = pneg %p153
        $region50: #{tpu_custom_call.1} parent=47 // pred_check_branch
          %716 = sbr.rel (%p714) target = $region52
        $region51: #{tpu_custom_call.1} parent=47 // pred_region
          %s717 = sand.u32 %s138, 1
          %s718 = scalar_lea.sflag [#allocation3], %s717
          %s719 = sand.u32 %s138, 1
          %s720 = smul.addr %s719, 160
          %s721 = scalar_lea.vmem [#allocation2], %s720
          %722 = dma.done %s718, 2560
        $region52: #{tpu_custom_call.1} parent=47 // pred_fallthru
          _
      $region48: #{tpu_custom_call.1} parent=5 // pred_fallthru
        _
    $region6: #{tpu_custom_call.1} parent=1 // loop_footer
      %s18 = sadd.s32 1, %s14
    $region7: #{tpu_custom_call.1} parent=1 // loop_footer_branch
      %13 = sbr.rel target = $region3
    $region8: #{tpu_custom_call.1} parent=1 // loop_exit
      _
    %723 = vsyncpa [#allocation3], 1
    %s724 = scalar_lea.sflag [#allocation3], 1
    %725 = vsyncpa %s724, 1

// kernel: tpu_custom_call.1
$region0: #{tpu_custom_call.1}
  #allocation0 [shape = 'u32[]', space=smem, size = 0x4, offset = 0x4, fixed_abs, tag = 'smem constant byte address 0x4 - core index']
  #allocation1 [shape = 'u32[144,128]{1,0:T(1,128)}', space=vmem, size = 0x12000, scoped, tag = 'internal scratch']
  %s0 = inlined_call_operand.vmem [shape: f32[300,32], index: 0, kind: input, shape index: {}]
  %s1 = inlined_call_operand.vmem [shape: bf16[32,128], index: 1, kind: input, shape index: {}]
  %s2 = inlined_call_operand.vmem [shape: f32[1,128], index: 2, kind: input, shape index: {}]
  %s3 = inlined_call_operand.vmem [shape: bf16[128,128], index: 3, kind: input, shape index: {}]
  %s4 = inlined_call_operand.vmem [shape: f32[1,128], index: 4, kind: input, shape index: {}]
  %s5 = inlined_call_operand.hbm [shape: f32[300,128], index: 5, kind: output, shape index: {}]
  %s6 = sld [smem:[#allocation0]]
  $region53: #{tpu_custom_call.1} parent=0
    _
  %s8 = ssub.s32 1, %s6
  %s9 = scalar_select 0, %s8, %s6
  $region1: #{tpu_custom_call.1} parent=0
    #allocation2 [shape = 'u8[163840]{0}', space=vmem, size = 0x28000, scoped, tag = 'output window, operand 0']
    #allocation3 [shape = 's32[2]{0}', space=sflag, size = 0x8, scoped, tag = 'scoped memory for tpu_custom_call.1']
    %10 = vsyncpa [#allocation3], 0
    %s11 = scalar_lea.sflag [#allocation3], 1
    %12 = vsyncpa %s11, 0
    loop: start=0, step=1, limit=4
    $region2: #{tpu_custom_call.1} parent=1 // loop_pre_header
      _
    $region3: #{tpu_custom_call.1} parent=1 // loop_header
      %s14 = sphi 0, %s18
      %p15 = scmp.ge.s32.totalorder %s14, 4
      %s24 = sphi 0, %s26
      %s27 = sphi 0, %s24
      %s28 = sphi 0, %s27
      %s44 = sphi 0, %s28
      %s48 = sphi 0, %s48
      %s50 = sphi 0, %s48
      %s51 = sphi 0, %s50
      %s65 = sphi 0, %s51
      %s69 = sphi 0, %s69
      %s71 = sphi 0, %s69
      %s72 = sphi 0, %s71
      %s86 = sphi 0, %s72
      %s90 = sphi 0, %s90
      %s92 = sphi 0, %s90
      %s93 = sphi 0, %s92
      %s107 = sphi 0, %s93
      %s111 = sphi 0, %s111
      %s113 = sphi 0, %s111
      %s114 = sphi 0, %s113
      %s128 = sphi 0, %s114
      %s134 = sphi 0, %s136
      %s137 = sphi 0, %s134
      %s138 = sphi 0, %s137
      %s154 = sphi 0, %s138
    $region4: #{tpu_custom_call.1} parent=1 // loop_header_branch
      %17 = sbr.rel (%p15) target = $region8
    $region5: #{tpu_custom_call.1} parent=1 // loop_body
      %s19 = ssub.s32 %s14, 1
      %s20 = ssub.s32 %s14, 2
      %s21 = sadd.s32 %s14, 1
      %s22 = ssub.s32 %s14, %s21
      %p23 = scmp.eq.s32.totalorder %s22, 0
      %s25 = sadd.s32 %s24, 1
      %s26 = scalar_select %p23, %s24, %s25
      %p29 = pneg %p23
      %p30 = scmp.eq.s32.totalorder %s14, 1
      %p31 = por %p29, %p30
      %p32 = scmp.ne.s32.totalorder %s24, %s27
      %p33 = scmp.eq.s32.totalorder %s14, 0
      %p34 = por %p32, %p33
      %p35 = scmp.ne.s32.totalorder %s24, %s27
      %p36 = scmp.eq.s32.totalorder %s19, 1
      %p37 = por %p35, %p36
      %p38 = scmp.ne.s32.totalorder %s27, %s28
      %p39 = scmp.eq.s32.totalorder %s19, 0
      %p40 = por %p38, %p39
      %p41 = scmp.ne.s32.totalorder %s27, %s28
      %p42 = scmp.eq.s32.totalorder %s20, 1
      %p43 = por %p41, %p42
      %p45 = scmp.ne.s32.totalorder %s28, %s44
      %p46 = scmp.eq.s32.totalorder %s20, 0
      %p47 = por %p45, %p46
      %s49 = sadd.s32 %s48, 1
      %p52 = scmp.eq.s32.totalorder %s14, 1
      %p53 = scmp.ne.s32.totalorder %s48, %s50
      %p54 = scmp.eq.s32.totalorder %s14, 0
      %p55 = por %p53, %p54
      %p56 = scmp.ne.s32.totalorder %s48, %s50
      %p57 = scmp.eq.s32.totalorder %s19, 1
      %p58 = por %p56, %p57
      %p59 = scmp.ne.s32.totalorder %s50, %s51
      %p60 = scmp.eq.s32.totalorder %s19, 0
      %p61 = por %p59, %p60
      %p62 = scmp.ne.s32.totalorder %s50, %s51
      %p63 = scmp.eq.s32.totalorder %s20, 1
      %p64 = por %p62, %p63
      %p66 = scmp.ne.s32.totalorder %s51, %s65
      %p67 = scmp.eq.s32.totalorder %s20, 0
      %p68 = por %p66, %p67
      %s70 = sadd.s32 %s69, 1
      %p73 = scmp.eq.s32.totalorder %s14, 1
      %p74 = scmp.ne.s32.totalorder %s69, %s71
      %p75 = scmp.eq.s32.totalorder %s14, 0
      %p76 = por %p74, %p75
      %p77 = scmp.ne.s32.totalorder %s69, %s71
      %p78 = scmp.eq.s32.totalorder %s19, 1
      %p79 = por %p77, %p78
      %p80 = scmp.ne.s32.totalorder %s71, %s72
      %p81 = scmp.eq.s32.totalorder %s19, 0
      %p82 = por %p80, %p81
      %p83 = scmp.ne.s32.totalorder %s71, %s72
      %p84 = scmp.eq.s32.totalorder %s20, 1
      %p85 = por %p83, %p84
      %p87 = scmp.ne.s32.totalorder %s72, %s86
      %p88 = scmp.eq.s32.totalorder %s20, 0
      %p89 = por %p87, %p88
      %s91 = sadd.s32 %s90, 1
      %p94 = scmp.eq.s32.totalorder %s14, 1
      %p95 = scmp.ne.s32.totalorder %s90, %s92
      %p96 = scmp.eq.s32.totalorder %s14, 0
      %p97 = por %p95, %p96
      %p98 = scmp.ne.s32.totalorder %s90, %s92
      %p99 = scmp.eq.s32.totalorder %s19, 1
      %p100 = por %p98, %p99
      %p101 = scmp.ne.s32.totalorder %s92, %s93
      %p102 = scmp.eq.s32.totalorder %s19, 0
      %p103 = por %p101, %p102
      %p104 = scmp.ne.s32.totalorder %s92, %s93
      %p105 = scmp.eq.s32.totalorder %s20, 1
      %p106 = por %p104, %p105
      %p108 = scmp.ne.s32.totalorder %s93, %s107
      %p109 = scmp.eq.s32.totalorder %s20, 0
      %p110 = por %p108, %p109
      %s112 = sadd.s32 %s111, 1
      %p115 = scmp.eq.s32.totalorder %s14, 1
      %p116 = scmp.ne.s32.totalorder %s111, %s113
      %p117 = scmp.eq.s32.totalorder %s14, 0
      %p118 = por %p116, %p117
      %p119 = scmp.ne.s32.totalorder %s111, %s113
      %p120 = scmp.eq.s32.totalorder %s19, 1
      %p121 = por %p119, %p120
      %p122 = scmp.ne.s32.totalorder %s113, %s114
      %p123 = scmp.eq.s32.totalorder %s19, 0
      %p124 = por %p122, %p123
      %p125 = scmp.ne.s32.totalorder %s113, %s114
      %p126 = scmp.eq.s32.totalorder %s20, 1
      %p127 = por %p125, %p126
      %p129 = scmp.ne.s32.totalorder %s114, %s128
      %p130 = scmp.eq.s32.totalorder %s20, 0
      %p131 = por %p129, %p130
      %s132 = ssub.s32 %s14, %s21
      %p133 = scmp.eq.s32.totalorder %s132, 0
      %s135 = sadd.s32 %s134, 1
      %s136 = scalar_select %p133, %s134, %s135
      %p139 = pneg %p133
      %p140 = scmp.eq.s32.totalorder %s14, 1
      %p141 = por %p139, %p140
      %p142 = scmp.ne.s32.totalorder %s134, %s137
      %p143 = scmp.eq.s32.totalorder %s14, 0
      %p144 = por %p142, %p143
      %p145 = scmp.ne.s32.totalorder %s134, %s137
      %p146 = scmp.eq.s32.totalorder %s19, 1
      %p147 = por %p145, %p146
      %p148 = scmp.ne.s32.totalorder %s137, %s138
      %p149 = scmp.eq.s32.totalorder %s19, 0
      %p150 = por %p148, %p149
      %p151 = scmp.ne.s32.totalorder %s137, %s138
      %p152 = scmp.eq.s32.totalorder %s20, 1
      %p153 = por %p151, %p152
      %p155 = scmp.ne.s32.totalorder %s138, %s154
      %p156 = scmp.eq.s32.totalorder %s20, 0
      %p157 = por %p155, %p156
      %p158 = scmp.le.s32.totalorder 1, %s14
      %p159 = scmp.lt.s32.totalorder %s14, 3
      %p160 = pnand %p158, %p159
      %p161 = pneg %p160
      // Predicated region
      $region9: #{tpu_custom_call.1} parent=5 // pred_check
        _
      $region10: #{tpu_custom_call.1} parent=5 // pred_check_branch
        %163 = sbr.rel (%p160) target = $region12
      $region11: #{tpu_custom_call.1} parent=5 // pred_region
        %s164 = ssub.s32 %s14, 1
        // Predicated region
        $region13: #{tpu_custom_call.1} parent=11 // pred_check
          %p165 = pneg %p61
        $region14: #{tpu_custom_call.1} parent=11 // pred_check_branch
          %167 = sbr.rel (%p165) target = $region16
        $region15: #{tpu_custom_call.1} parent=11 // pred_region
          _
        $region16: #{tpu_custom_call.1} parent=11 // pred_fallthru
          _
        // Predicated region
        $region17: #{tpu_custom_call.1} parent=11 // pred_check
          %p168 = pneg %p82
        $region18: #{tpu_custom_call.1} parent=11 // pred_check_branch
          %170 = sbr.rel (%p168) target = $region20
        $region19: #{tpu_custom_call.1} parent=11 // pred_region
          _
        $region20: #{tpu_custom_call.1} parent=11 // pred_fallthru
          _
        // Predicated region
        $region21: #{tpu_custom_call.1} parent=11 // pred_check
          %p171 = pneg %p103
        $region22: #{tpu_custom_call.1} parent=11 // pred_check_branch
          %173 = sbr.rel (%p171) target = $region24
        $region23: #{tpu_custom_call.1} parent=11 // pred_region
          _
        $region24: #{tpu_custom_call.1} parent=11 // pred_fallthru
          _
        // Predicated region
        $region25: #{tpu_custom_call.1} parent=11 // pred_check
          %p174 = pneg %p124
        $region26: #{tpu_custom_call.1} parent=11 // pred_check_branch
          %176 = sbr.rel (%p174) target = $region28
        $region27: #{tpu_custom_call.1} parent=11 // pred_region
          _
        $region28: #{tpu_custom_call.1} parent=11 // pred_fallthru
          _
      $region12: #{tpu_custom_call.1} parent=5 // pred_fallthru
        _
      %p177 = scmp.lt.s32.totalorder %s14, 2
      // Predicated region
      $region29: #{tpu_custom_call.1} parent=5 // pred_check
        %p178 = pneg %p177
      $region30: #{tpu_custom_call.1} parent=5 // pred_check_branch
        %180 = sbr.rel (%p178) target = $region32
      $region31: #{tpu_custom_call.1} parent=5 // pred_region
        // Predicated region
        $region33: #{tpu_custom_call.1} parent=31 // pred_check
          %p181 = pneg %p34
        $region34: #{tpu_custom_call.1} parent=31 // pred_check_branch
          %183 = sbr.rel (%p181) target = $region36
        $region35: #{tpu_custom_call.1} parent=31 // pred_region
          %s184 = smul.u32 20, %s14
          %s185 = ssub.s32 38, %s184
          %p186 = scmp.lt.s32.totalorder %s185, 20
          %s187 = scalar_select %p186, %s185, 20
          %s188 = smul.u32 128, %s187
          %p189 = scmp.lt.s32.totalorder %s184, 37
          %s190 = scalar_select %p189, %s184, 37
          %s191 = smul.addr %s190, 8
          %s192 = scalar_lea.vmem %s0, %s191
          %s193 = smul.u32 20, %s14
          %s194 = ssub.s32 38, %s193
          %p195 = scmp.lt.s32.totalorder %s194, 20
          %s196 = scalar_select %p195, %s194, 20
          %s197 = smul.u32 128, %s196
        $region36: #{tpu_custom_call.1} parent=31 // pred_fallthru
          _
      $region32: #{tpu_custom_call.1} parent=5 // pred_fallthru
        _
      %p198 = scmp.le.s32.totalorder 1, %s14
      %p199 = scmp.lt.s32.totalorder %s14, 3
      %p200 = pnand %p198, %p199
      %p201 = pneg %p200
      // Predicated region
      $region37: #{tpu_custom_call.1} parent=5 // pred_check
        _
      $region38: #{tpu_custom_call.1} parent=5 // pred_check_branch
        %203 = sbr.rel (%p200) target = $region40
      $region39: #{tpu_custom_call.1} parent=5 // pred_region
        %s204 = ssub.s32 %s14, 1
        %s205 = smul.u32 20, %s19
        %s206 = ssub.s32 38, %s205
        %p207 = scmp.lt.s32.totalorder %s206, 20
        %s208 = scalar_select %p207, %s206, 20
        %s209 = smul.u32 128, %s208
        %p210 = scmp.lt.s32.totalorder %s205, 37
        %s211 = scalar_select %p210, %s205, 37
        %s212 = smul.addr %s211, 8
        %s213 = scalar_lea.vmem %s0, %s212
        %p214 = pneg %p40
        %p215 = pneg %p37
        %p216 = pneg %p61
        %p217 = pneg %p58
        %p218 = pneg %p82
        %p219 = pneg %p79
        %p220 = pneg %p103
        %p221 = pneg %p100
        %p222 = pneg %p124
        %p223 = pneg %p121
        %p224 = pneg %p150
        %p225 = pneg %p147
        %s226 = sand.u32 %s137, 1
        %s227 = scalar_lea.sflag [#allocation3], %s226
        %s228 = sand.u32 %s137, 1
        %s229 = smul.addr %s228, 160
        %s230 = scalar_lea.vmem [#allocation2], %s229
        %s231 = smul.u32 20, %s19
        %s232 = ssub.s32 38, %s231
        %p233 = scmp.lt.s32.totalorder %s232, 20
        %s234 = scalar_select %p233, %s232, 20
        %s235 = smul.u32 128, %s234
        %p236 = scmp.lt.s32.totalorder %s231, 37
        %s237 = scalar_select %p236, %s231, 37
        %s238 = smul.addr %s237, 8
        %s239 = scalar_lea.vmem %s0, %s238
        %s240 = smul.u32 20, %s19
        %s241 = ssub.s32 38, %s240
        %p242 = scmp.lt.s32.totalorder %s241, 20
        %s243 = scalar_select %p242, %s241, 20
        %s244 = smul.u32 128, %s243
        %s245 = smul.u32 20, %s19
        %s246 = ssub.s32 38, %s245
        %p247 = scmp.lt.s32.totalorder %s246, 20
        %s248 = scalar_select %p247, %s246, 20
        %s249 = smul.u32 128, %s248
        %v251 = vld [vmem:[%s239] sm:$0xff]
        %v252 = vld [vmem:[%s239 + $0x8] sm:$0xff]
        %v253 = vld [vmem:[%s239 + $0x10] sm:$0xff]
        %v254 = vld [vmem:[%s239 + $0x18] sm:$0xff]
        %v255 = vld [vmem:[%s239 + $0x20] sm:$0xff]
        %v256 = vld [vmem:[%s239 + $0x28] sm:$0xff]
        %v257 = vld [vmem:[%s239 + $0x30] sm:$0xff]
        %v258 = vld [vmem:[%s239 + $0x38] sm:$0xff]
        %v259 = vld [vmem:[%s239 + $0x40] sm:$0xff]
        %v260 = vld [vmem:[%s239 + $0x48] sm:$0xff]
        %v261 = vld [vmem:[%s239 + $0x50] sm:$0xff]
        %v262 = vld [vmem:[%s239 + $0x58] sm:$0xff]
        %v263 = vld [vmem:[%s239 + $0x60] sm:$0xff]
        %v264 = vld [vmem:[%s239 + $0x68] sm:$0xff]
        %v265 = vld [vmem:[%s239 + $0x70] sm:$0xff]
        %v266 = vld [vmem:[%s239 + $0x78] sm:$0xff]
        %v267 = vld [vmem:[%s239 + $0x80] sm:$0xff]
        %v268 = vld [vmem:[%s239 + $0x88] sm:$0xff]
        %v269 = vld [vmem:[%s239 + $0x90] sm:$0xff]
        %v270 = vld [vmem:[%s239 + $0x98] sm:$0xff]
        %v271 = vpack.c.bf16 %v252, %v251
        %v272 = vpack.c.bf16 %v254, %v253
        %v273 = vpack.c.bf16 %v256, %v255
        %v274 = vpack.c.bf16 %v258, %v257
        %v275 = vpack.c.bf16 %v260, %v259
        %v276 = vpack.c.bf16 %v262, %v261
        %v277 = vpack.c.bf16 %v264, %v263
        %v278 = vpack.c.bf16 %v266, %v265
        %v279 = vpack.c.bf16 %v268, %v267
        %v280 = vpack.c.bf16 %v270, %v269
        %v281 = vld [vmem:[%s1] sm:$0xf]
        %v282 = vld [vmem:[%s1 + $0x4] sm:$0xf]
        %v283 = vld [vmem:[%s1 + $0x8] sm:$0xf]
        %v284 = vld [vmem:[%s1 + $0xc] sm:$0xf]
        %v285 = vld [vmem:[%s2] sm:$0x1]
        %v287 = vlaneseq
        %v288 = vshrl.u32 %v287, 7
        %v289 = vsub.s32 0, %v288
        %v290 = vrot.slane %v285, %v289
        %v296 = vunpack.c.l.b16 %v281
        %v297 = vunpack.c.l.b16 %v282
        %v298 = vunpack.c.l.b16 %v283
        %v299 = vunpack.c.l.b16 %v284
        %v300 = vpack.c.b16 %v297, %v296
        %v301 = vpack.c.b16 %v299, %v298
        %vm304 = vcmask 261120
        %v306 = vsel %vm304, %v271, 0
        %v309 = vsel %vm304, %v272, 0
        %v312 = vsel %vm304, %v273, 0
        %v315 = vsel %vm304, %v274, 0
        %v318 = vsel %vm304, %v275, 0
        %v321 = vsel %vm304, %v276, 0
        %v324 = vsel %vm304, %v277, 0
        %v327 = vsel %vm304, %v278, 0
        %v330 = vsel %vm304, %v279, 0
        %v333 = vsel %vm304, %v280, 0
        %335 = vmatprep.subr.bf16.mxu0 0
        %336 = vmatpush1.bf16.msra.mxu0 0
        %337 = vmatprep.subr.bf16.mxu0 0
        %338 = vmatpush1.bf16.msra.mxu0 0
        %339 = vmatprep.subr.bf16.mxu0 0
        %340 = vmatpush1.bf16.msra.mxu0 0
        %341 = vmatprep.subr.bf16.mxu0 0
        %342 = vmatpush1.bf16.msra.mxu0 0
        %343 = vmatprep.subr.bf16.mxu0 0
        %344 = vmatpush1.bf16.msra.mxu0 0
        %345 = vmatprep.subr.bf16.mxu0 0
        %346 = vmatpush1.bf16.msra.mxu0 0
        %347 = vmatprep.subr.bf16.mxu0 0
        %348 = vmatpush1.bf16.msra.mxu0 %v301
        %349 = vmatprep.subr.bf16.mxu0 0
        %350 = vmatpush1.bf16.msra.mxu0 %v300
        %351 = vmatprep.subr.bf16.mxu0 0
        %352 = vmatpush2.bf16.msra.mxu0 0
        %353 = vmatprep.subr.bf16.mxu0 0
        %354 = vmatpush2.bf16.msra.mxu0 0
        %355 = vmatprep.subr.bf16.mxu0 0
        %356 = vmatpush2.bf16.msra.mxu0 0
        %357 = vmatprep.subr.bf16.mxu0 0
        %358 = vmatpush2.bf16.msra.mxu0 0
        %359 = vmatprep.subr.bf16.mxu0 0
        %360 = vmatpush2.bf16.msra.mxu0 0
        %361 = vmatprep.subr.bf16.mxu0 0
        %362 = vmatpush2.bf16.msra.mxu0 0
        %363 = vmatprep.subr.bf16.mxu0 0
        %364 = vmatpush2.bf16.msra.mxu0 0
        %365 = vmatprep.subr.bf16.mxu0 0
        %366 = vmatpush2.bf16.msra.mxu0 0
        %367 = vmatprep.mubr.bf16.mxu0 0
        %368 = vmatmul.mubr.bf16.gmra.mxu0 %v306
        %v369 = vpop.f32.mrf.mxu0
        %v370 = vadd.f32 %v290, %v369
        %v371 = vpop.f32.mrf.mxu0
        %v372 = vpop.f32.mrf.mxu0
        %v373 = vadd.f32 %v290, %v372
        %v374 = vpop.f32.mrf.mxu0
        %375 = vmatprep.mubr.bf16.mxu0 0
        %376 = vmatmul.mubr.bf16.gmra.mxu0 %v309
        %v377 = vpop.f32.mrf.mxu0
        %v378 = vadd.f32 %v290, %v377
        %v379 = vpop.f32.mrf.mxu0
        %v380 = vpop.f32.mrf.mxu0
        %v381 = vadd.f32 %v290, %v380
        %v382 = vpop.f32.mrf.mxu0
        %383 = vmatprep.mubr.bf16.mxu0 0
        %384 = vmatmul.mubr.bf16.gmra.mxu0 %v312
        %v385 = vpop.f32.mrf.mxu0
        %v386 = vadd.f32 %v290, %v385
        %v387 = vpop.f32.mrf.mxu0
        %v388 = vpop.f32.mrf.mxu0
        %v389 = vadd.f32 %v290, %v388
        %v390 = vpop.f32.mrf.mxu0
        %391 = vmatprep.mubr.bf16.mxu0 0
        %392 = vmatmul.mubr.bf16.gmra.mxu0 %v315
        %v393 = vpop.f32.mrf.mxu0
        %v394 = vadd.f32 %v290, %v393
        %v395 = vpop.f32.mrf.mxu0
        %v396 = vpop.f32.mrf.mxu0
        %v397 = vadd.f32 %v290, %v396
        %v398 = vpop.f32.mrf.mxu0
        %399 = vmatprep.mubr.bf16.mxu0 0
        %400 = vmatmul.mubr.bf16.gmra.mxu0 %v318
        %v401 = vpop.f32.mrf.mxu0
        %v402 = vadd.f32 %v290, %v401
        %v403 = vpop.f32.mrf.mxu0
        %v404 = vpop.f32.mrf.mxu0
        %v405 = vadd.f32 %v290, %v404
        %v406 = vpop.f32.mrf.mxu0
        %407 = vmatprep.mubr.bf16.mxu0 0
        %408 = vmatmul.mubr.bf16.gmra.mxu0 %v321
        %v409 = vpop.f32.mrf.mxu0
        %v410 = vadd.f32 %v290, %v409
        %v411 = vpop.f32.mrf.mxu0
        %v412 = vpop.f32.mrf.mxu0
        %v413 = vadd.f32 %v290, %v412
        %v414 = vpop.f32.mrf.mxu0
        %415 = vmatprep.mubr.bf16.mxu0 0
        %416 = vmatmul.mubr.bf16.gmra.mxu0 %v324
        %v417 = vpop.f32.mrf.mxu0
        %v418 = vadd.f32 %v290, %v417
        %v419 = vpop.f32.mrf.mxu0
        %v420 = vpop.f32.mrf.mxu0
        %v421 = vadd.f32 %v290, %v420
        %v422 = vpop.f32.mrf.mxu0
        %423 = vmatprep.mubr.bf16.mxu0 0
        %424 = vmatmul.mubr.bf16.gmra.mxu0 %v327
        %v425 = vpop.f32.mrf.mxu0
        %v426 = vadd.f32 %v290, %v425
        %v427 = vpop.f32.mrf.mxu0
        %v428 = vpop.f32.mrf.mxu0
        %v429 = vadd.f32 %v290, %v428
        %v430 = vpop.f32.mrf.mxu0
        %431 = vmatprep.mubr.bf16.mxu0 0
        %432 = vmatmul.mubr.bf16.gmra.mxu0 %v330
        %v433 = vpop.f32.mrf.mxu0
        %v434 = vadd.f32 %v290, %v433
        %v435 = vpop.f32.mrf.mxu0
        %v436 = vpop.f32.mrf.mxu0
        %v437 = vadd.f32 %v290, %v436
        %v438 = vpop.f32.mrf.mxu0
        %439 = vmatprep.mubr.bf16.mxu0 0
        %440 = vmatmul.mubr.bf16.gmra.mxu0 %v333
        %v441 = vpop.f32.mrf.mxu0
        %v442 = vadd.f32 %v290, %v441
        %v443 = vpop.f32.mrf.mxu0
        %v444 = vpop.f32.mrf.mxu0
        %v445 = vadd.f32 %v290, %v444
        %v446 = vpop.f32.mrf.mxu0
        %447 = vdwg.mxu0
        %v448 = vmax.f32 %v370, 0.0
        %v449 = vmax.f32 %v373, 0.0
        %v450 = vmax.f32 %v378, 0.0
        %v451 = vmax.f32 %v381, 0.0
        %v452 = vmax.f32 %v386, 0.0
        %v453 = vmax.f32 %v389, 0.0
        %v454 = vmax.f32 %v394, 0.0
        %v455 = vmax.f32 %v397, 0.0
        %v456 = vmax.f32 %v402, 0.0
        %v457 = vmax.f32 %v405, 0.0
        %v458 = vmax.f32 %v410, 0.0
        %v459 = vmax.f32 %v413, 0.0
        %v460 = vmax.f32 %v418, 0.0
        %v461 = vmax.f32 %v421, 0.0
        %v462 = vmax.f32 %v426, 0.0
        %v463 = vmax.f32 %v429, 0.0
        %v464 = vmax.f32 %v434, 0.0
        %v465 = vmax.f32 %v437, 0.0
        %v466 = vmax.f32 %v442, 0.0
        %v467 = vmax.f32 %v445, 0.0
        %v468 = vpack.c.bf16 %v449, %v448
        %v469 = vpack.c.bf16 %v451, %v450
        %v470 = vpack.c.bf16 %v453, %v452
        %v471 = vpack.c.bf16 %v455, %v454
        %v472 = vpack.c.bf16 %v457, %v456
        %v473 = vpack.c.bf16 %v459, %v458
        %v474 = vpack.c.bf16 %v461, %v460
        %v475 = vpack.c.bf16 %v463, %v462
        %v476 = vpack.c.bf16 %v465, %v464
        %v477 = vpack.c.bf16 %v467, %v466
        %v478 = vld [vmem:[%s3] sm:$0xf]
        %v479 = vld [vmem:[%s3 + $0x4] sm:$0xf]
        %v480 = vld [vmem:[%s3 + $0x8] sm:$0xf]
        %v481 = vld [vmem:[%s3 + $0xc] sm:$0xf]
        %v482 = vld [vmem:[%s3 + $0x10] sm:$0xf]
        %v483 = vld [vmem:[%s3 + $0x14] sm:$0xf]
        %v484 = vld [vmem:[%s3 + $0x18] sm:$0xf]
        %v485 = vld [vmem:[%s3 + $0x1c] sm:$0xf]
        %v486 = vld [vmem:[%s3 + $0x20] sm:$0xf]
        %v487 = vld [vmem:[%s3 + $0x24] sm:$0xf]
        %v488 = vld [vmem:[%s3 + $0x28] sm:$0xf]
        %v489 = vld [vmem:[%s3 + $0x2c] sm:$0xf]
        %v490 = vld [vmem:[%s3 + $0x30] sm:$0xf]
        %v491 = vld [vmem:[%s3 + $0x34] sm:$0xf]
        %v492 = vld [vmem:[%s3 + $0x38] sm:$0xf]
        %v493 = vld [vmem:[%s3 + $0x3c] sm:$0xf]
        %v494 = vld [vmem:[%s4] sm:$0x1]
        %v496 = vlaneseq
        %v497 = vshrl.u32 %v496, 7
        %v498 = vsub.s32 0, %v497
        %v499 = vrot.slane %v494, %v498
        %v517 = vunpack.c.l.b16 %v478
        %v518 = vunpack.c.l.b16 %v479
        %v519 = vunpack.c.l.b16 %v480
        %v520 = vunpack.c.l.b16 %v481
        %v521 = vunpack.c.l.b16 %v482
        %v522 = vunpack.c.l.b16 %v483
        %v523 = vunpack.c.l.b16 %v484
        %v524 = vunpack.c.l.b16 %v485
        %v525 = vunpack.c.l.b16 %v486
        %v526 = vunpack.c.l.b16 %v487
        %v527 = vunpack.c.l.b16 %v488
        %v528 = vunpack.c.l.b16 %v489
        %v529 = vunpack.c.l.b16 %v490
        %v530 = vunpack.c.l.b16 %v491
        %v531 = vunpack.c.l.b16 %v492
        %v532 = vunpack.c.l.b16 %v493
        %v533 = vpack.c.b16 %v518, %v517
        %v534 = vpack.c.b16 %v520, %v519
        %v535 = vpack.c.b16 %v522, %v521
        %v536 = vpack.c.b16 %v524, %v523
        %v537 = vpack.c.b16 %v526, %v525
        %v538 = vpack.c.b16 %v528, %v527
        %v539 = vpack.c.b16 %v530, %v529
        %v540 = vpack.c.b16 %v532, %v531
        %549 = vmatprep.subr.bf16.mxu0 0
        %550 = vmatpush1.bf16.msra.mxu0 %v540
        %551 = vmatprep.subr.bf16.mxu0 0
        %552 = vmatpush1.bf16.msra.mxu0 %v539
        %553 = vmatprep.subr.bf16.mxu0 0
        %554 = vmatpush1.bf16.msra.mxu0 %v538
        %555 = vmatprep.subr.bf16.mxu0 0
        %556 = vmatpush1.bf16.msra.mxu0 %v537
        %557 = vmatprep.subr.bf16.mxu0 0
        %558 = vmatpush1.bf16.msra.mxu0 %v536
        %559 = vmatprep.subr.bf16.mxu0 0
        %560 = vmatpush1.bf16.msra.mxu0 %v535
        %561 = vmatprep.subr.bf16.mxu0 0
        %562 = vmatpush1.bf16.msra.mxu0 %v534
        %563 = vmatprep.subr.bf16.mxu0 0
        %564 = vmatpush1.bf16.msra.mxu0 %v533
        %565 = vmatprep.subr.bf16.mxu0 0
        %566 = vmatpush2.bf16.msra.mxu0 0
        %567 = vmatprep.subr.bf16.mxu0 0
        %568 = vmatpush2.bf16.msra.mxu0 0
        %569 = vmatprep.subr.bf16.mxu0 0
        %570 = vmatpush2.bf16.msra.mxu0 0
        %571 = vmatprep.subr.bf16.mxu0 0
        %572 = vmatpush2.bf16.msra.mxu0 0
        %573 = vmatprep.subr.bf16.mxu0 0
        %574 = vmatpush2.bf16.msra.mxu0 0
        %575 = vmatprep.subr.bf16.mxu0 0
        %576 = vmatpush2.bf16.msra.mxu0 0
        %577 = vmatprep.subr.bf16.mxu0 0
        %578 = vmatpush2.bf16.msra.mxu0 0
        %579 = vmatprep.subr.bf16.mxu0 0
        %580 = vmatpush2.bf16.msra.mxu0 0
        %581 = vmatprep.mubr.bf16.mxu0 0
        %582 = vmatmul.mubr.bf16.gmra.mxu0 %v468
        %v583 = vpop.f32.mrf.mxu0
        %v584 = vadd.f32 %v499, %v583
        %v585 = vpop.f32.mrf.mxu0
        %v586 = vpop.f32.mrf.mxu0
        %v587 = vadd.f32 %v499, %v586
        %v588 = vpop.f32.mrf.mxu0
        %589 = vmatprep.mubr.bf16.mxu0 0
        %590 = vmatmul.mubr.bf16.gmra.mxu0 %v469
        %v591 = vpop.f32.mrf.mxu0
        %v592 = vadd.f32 %v499, %v591
        %v593 = vpop.f32.mrf.mxu0
        %v594 = vpop.f32.mrf.mxu0
        %v595 = vadd.f32 %v499, %v594
        %v596 = vpop.f32.mrf.mxu0
        %597 = vmatprep.mubr.bf16.mxu0 0
        %598 = vmatmul.mubr.bf16.gmra.mxu0 %v470
        %v599 = vpop.f32.mrf.mxu0
        %v600 = vadd.f32 %v499, %v599
        %v601 = vpop.f32.mrf.mxu0
        %v602 = vpop.f32.mrf.mxu0
        %v603 = vadd.f32 %v499, %v602
        %v604 = vpop.f32.mrf.mxu0
        %605 = vmatprep.mubr.bf16.mxu0 0
        %606 = vmatmul.mubr.bf16.gmra.mxu0 %v471
        %v607 = vpop.f32.mrf.mxu0
        %v608 = vadd.f32 %v499, %v607
        %v609 = vpop.f32.mrf.mxu0
        %v610 = vpop.f32.mrf.mxu0
        %v611 = vadd.f32 %v499, %v610
        %v612 = vpop.f32.mrf.mxu0
        %613 = vmatprep.mubr.bf16.mxu0 0
        %614 = vmatmul.mubr.bf16.gmra.mxu0 %v472
        %v615 = vpop.f32.mrf.mxu0
        %v616 = vadd.f32 %v499, %v615
        %v617 = vpop.f32.mrf.mxu0
        %v618 = vpop.f32.mrf.mxu0
        %v619 = vadd.f32 %v499, %v618
        %v620 = vpop.f32.mrf.mxu0
        %621 = vmatprep.mubr.bf16.mxu0 0
        %622 = vmatmul.mubr.bf16.gmra.mxu0 %v473
        %v623 = vpop.f32.mrf.mxu0
        %v624 = vadd.f32 %v499, %v623
        %v625 = vpop.f32.mrf.mxu0
        %v626 = vpop.f32.mrf.mxu0
        %v627 = vadd.f32 %v499, %v626
        %v628 = vpop.f32.mrf.mxu0
        %629 = vmatprep.mubr.bf16.mxu0 0
        %630 = vmatmul.mubr.bf16.gmra.mxu0 %v474
        %v631 = vpop.f32.mrf.mxu0
        %v632 = vadd.f32 %v499, %v631
        %v633 = vpop.f32.mrf.mxu0
        %v634 = vpop.f32.mrf.mxu0
        %v635 = vadd.f32 %v499, %v634
        %v636 = vpop.f32.mrf.mxu0
        %637 = vmatprep.mubr.bf16.mxu0 0
        %638 = vmatmul.mubr.bf16.gmra.mxu0 %v475
        %v639 = vpop.f32.mrf.mxu0
        %v640 = vadd.f32 %v499, %v639
        %v641 = vpop.f32.mrf.mxu0
        %v642 = vpop.f32.mrf.mxu0
        %v643 = vadd.f32 %v499, %v642
        %v644 = vpop.f32.mrf.mxu0
        %645 = vmatprep.mubr.bf16.mxu0 0
        %646 = vmatmul.mubr.bf16.gmra.mxu0 %v476
        %v647 = vpop.f32.mrf.mxu0
        %v648 = vadd.f32 %v499, %v647
        %v649 = vpop.f32.mrf.mxu0
        %v650 = vpop.f32.mrf.mxu0
        %v651 = vadd.f32 %v499, %v650
        %v652 = vpop.f32.mrf.mxu0
        %653 = vmatprep.mubr.bf16.mxu0 0
        %654 = vmatmul.mubr.bf16.gmra.mxu0 %v477
        %v655 = vpop.f32.mrf.mxu0
        %v656 = vadd.f32 %v499, %v655
        %v657 = vpop.f32.mrf.mxu0
        %v658 = vpop.f32.mrf.mxu0
        %v659 = vadd.f32 %v499, %v658
        %v660 = vpop.f32.mrf.mxu0
        %661 = vdwg.mxu0
        %662 = vst [vmem:[%s230] sm:$0xff] %v584
        %663 = vst [vmem:[%s230 + $0x8] sm:$0xff] %v587
        %664 = vst [vmem:[%s230 + $0x10] sm:$0xff] %v592
        %665 = vst [vmem:[%s230 + $0x18] sm:$0xff] %v595
        %666 = vst [vmem:[%s230 + $0x20] sm:$0xff] %v600
        %667 = vst [vmem:[%s230 + $0x28] sm:$0xff] %v603
        %668 = vst [vmem:[%s230 + $0x30] sm:$0xff] %v608
        %669 = vst [vmem:[%s230 + $0x38] sm:$0xff] %v611
        %670 = vst [vmem:[%s230 + $0x40] sm:$0xff] %v616
        %671 = vst [vmem:[%s230 + $0x48] sm:$0xff] %v619
        %672 = vst [vmem:[%s230 + $0x50] sm:$0xff] %v624
        %673 = vst [vmem:[%s230 + $0x58] sm:$0xff] %v627
        %674 = vst [vmem:[%s230 + $0x60] sm:$0xff] %v632
        %675 = vst [vmem:[%s230 + $0x68] sm:$0xff] %v635
        %676 = vst [vmem:[%s230 + $0x70] sm:$0xff] %v640
        %677 = vst [vmem:[%s230 + $0x78] sm:$0xff] %v643
        %678 = vst [vmem:[%s230 + $0x80] sm:$0xff] %v648
        %679 = vst [vmem:[%s230 + $0x88] sm:$0xff] %v651
        %680 = vst [vmem:[%s230 + $0x90] sm:$0xff] %v656
        %681 = vst [vmem:[%s230 + $0x98] sm:$0xff] %v659
        %s682 = sand.u32 %s137, 1
        %s683 = scalar_lea.sflag [#allocation3], %s682
        %s684 = sand.u32 %s137, 1
        %s685 = smul.addr %s684, 160
        %s686 = scalar_lea.vmem [#allocation2], %s685
        // Predicated region
        $region41: #{tpu_custom_call.1} parent=39 // pred_check
          %p687 = pneg %p147
        $region42: #{tpu_custom_call.1} parent=39 // pred_check_branch
          %689 = sbr.rel (%p687) target = $region44
        $region43: #{tpu_custom_call.1} parent=39 // pred_region
          %s690 = smul.u32 20, %s19
          %s691 = ssub.s32 38, %s690
          %p692 = scmp.lt.s32.totalorder %s691, 20
          %s693 = scalar_select %p692, %s691, 20
          %s694 = smul.u32 128, %s693
          %s696 = ssub.s32 2560, %s694
          %697 = vsyncadd %s683, %s696
          %p698 = scmp.ne.s32.totalorder 0, %s694
          %s699 = smul.addr %s690, 128
          %s700 = scalar_lea.hbm %s5, %s699
          %s701 = smul.u32 8, %s693
          %s702 = sshll.u32 %s686, 4
          %s703 = int_to_ptr.vmem [resolvable:$true] %s702
          %s704 = sshll.u32 %s701, 4
          %708 = dma.vmem_to_hbm [thread:$0]  (%p698), %s703, %s704, %s700, %s683, 128, 128, 8
        $region44: #{tpu_custom_call.1} parent=39 // pred_fallthru
          _
      $region40: #{tpu_custom_call.1} parent=5 // pred_fallthru
        _
      %p709 = scmp.le.s32.totalorder 2, %s14
      // Predicated region
      $region45: #{tpu_custom_call.1} parent=5 // pred_check
        %p710 = pneg %p709
      $region46: #{tpu_custom_call.1} parent=5 // pred_check_branch
        %712 = sbr.rel (%p710) target = $region48
      $region47: #{tpu_custom_call.1} parent=5 // pred_region
        %s713 = ssub.s32 %s14, 2
        // Predicated region
        $region49: #{tpu_custom_call.1} parent=47 // pred_check
          %p714 = pneg %p153
        $region50: #{tpu_custom_call.1} parent=47 // pred_check_branch
          %716 = sbr.rel (%p714) target = $region52
        $region51: #{tpu_custom_call.1} parent=47 // pred_region
          %s717 = sand.u32 %s138, 1
          %s718 = scalar_lea.sflag [#allocation3], %s717
          %s719 = sand.u32 %s138, 1
          %s720 = smul.addr %s719, 160
          %s721 = scalar_lea.vmem [#allocation2], %s720
          %722 = dma.done %s718, 2560
        $region52: #{tpu_custom_call.1} parent=47 // pred_fallthru
          _
      $region48: #{tpu_custom_call.1} parent=5 // pred_fallthru
        _
    $region6: #{tpu_custom_call.1} parent=1 // loop_footer
      %s18 = sadd.s32 1, %s14
    $region7: #{tpu_custom_call.1} parent=1 // loop_footer_branch
      %13 = sbr.rel target = $region3
    $region8: #{tpu_custom_call.1} parent=1 // loop_exit
      _
    %723 = vsyncpa [#allocation3], 1
    %s724 = scalar_lea.sflag [#allocation3], 1
    %725 = vsyncpa %s724, 1

</llo_original>
